<compile_context>
chip_gen: v6e
topology: v6e:2x2x1
jax: 0.10.0
libtpu: 0.0.40
codegen_flags: <defaults>
</compile_context>

<pallas_src>
import jax
import jax.numpy as jnp
from jax import lax
from jax.experimental import pallas as pl
from jax.experimental.pallas import tpu as pltpu


def _make_mha_kernel(H, D):
    """Fused MHA forward kernel.  grid = (B, num_q_tiles)."""
    inv_sqrt_d = 1.0 / float(D) ** 0.5

    def kernel(q_ref, k_ref, v_ref, wblk_ref, wout_ref, rowkeep_ref,
               colkeep_ref, o_ref, kh_ref, vh_ref, ctx_ref):
        # Blocks:
        #   q        (1, Tq, E) bf16   query tile
        #   k, v     (1, L,  E) bf16   full keys/values (DMA'd only when b changes)
        #   wblk     (E, E)     bf16   block_diag(HeadLinear)
        #   wout     (E, E)     bf16   OutputLiner
        #   rowkeep  (1, Tq, 1) f32    1 - KMask (0.0 == masked query row)
        #   colkeep  (1, L,  1) f32    1 - QMask (0.0 == zeroed key column)
        #   o        (1, Tq, E) f32
        # Scratch (persists across the q-tile axis of one batch element):
        #   kh, vh   (L, E) bf16 ; ctx (Tq, E) bf16

        # K/V projections once per batch element (q-tile axis is the inner,
        # "arbitrary" grid axis).  QMask is folded into V here.
        @pl.when(pl.program_id(1) == 0)
        def _():
            wblk = wblk_ref[...]
            kh_ref[...] = jnp.dot(
                k_ref[0], wblk,
                preferred_element_type=jnp.float32).astype(jnp.bfloat16)
            vh_ref[...] = (jnp.dot(v_ref[0], wblk,
                                   preferred_element_type=jnp.float32)
                           * colkeep_ref[0]).astype(jnp.bfloat16)

        # Query projection for this tile.  1/sqrt(D) and the KMask row mask
        # are folded into qh (zero row -> uniform softmax row == masked_fill).
        qh = (jnp.dot(q_ref[0], wblk_ref[...],
                      preferred_element_type=jnp.float32)
              * (inv_sqrt_d * rowkeep_ref[0])).astype(jnp.bfloat16)

        # Per-head attention.  Static slices keep lane offsets compile-time
        # constant (fully lane-aligned whenever D is a multiple of 128).
        # TODO(synk): for large H / D < 128, switch to lax.fori_loop over a
        # head-major lane-padded (H, Tq, 128) scratch to bound live ranges and
        # avoid sub-128-lane slices.
        for h in range(H):
            lo = h * D
            # scores = qh_h @ kh_h^T, contraction on last dims (no transpose).
            s = lax.dot_general(qh[:, lo:lo + D], kh_ref[:, lo:lo + D],
                                (((1,), (1,)), ((), ())),
                                preferred_element_type=jnp.float32)
            # Softmax over the key axis, normalization deferred to the (Tq, D)
            # context.  TODO(synk): on v6e/v7x cast (s - m) to bf16 before exp
            # (EUP bf16); kept f32 so the same kernel is also right for v5e.
            m = jnp.max(s, axis=-1, keepdims=True)
            e = jnp.exp(s - m)
            r = pl.reciprocal(jnp.sum(e, axis=-1, keepdims=True), approx=True)
            ctx = jnp.dot(e.astype(jnp.bfloat16), vh_ref[:, lo:lo + D],
                          preferred_element_type=jnp.float32)
            ctx_ref[:, lo:lo + D] = (ctx * r).astype(jnp.bfloat16)

        # Fused output projection: lane-dense (Tq, E) @ (E, E).
        o_ref[0] = jnp.dot(ctx_ref[...], wout_ref[...],
                           preferred_element_type=jnp.float32
                           ).astype(o_ref.dtype)

    return kernel


def multi_head_attention(Q, K, V, QMask, KMask, head_linear, output_linear,
                         head_num, max_length):
    B, L, E = Q.shape
    H = head_num
    D = E // H
    assert L == max_length and E % H == 0

    # Query-tile size: bounds VMEM (scores are (Tq, L), not (L, L)) and adds
    # grid steps so the work spreads over cores even at small B.
    TQ = L if L <= 256 else 256
    assert L % TQ == 0  # TODO(synk): handle ragged L with a masked tail tile.
    nq = L // TQ

    # Fuse per-head HeadLinear into a block-diagonal (E,E) weight (tiny,
    # one-time) so the head projections become one lane-dense matmul on the
    # original [B,L,E] layout -- no head split/merge transposes anywhere.
    # TODO(synk): on v5e with D >= 128 prefer H per-head (L,D)@(D,D) matmuls
    # (block-diag spends Hx extra MACs on the 128-wide MXU).
    wblk = jnp.zeros((E, E), head_linear.dtype)
    for h in range(H):
        wblk = wblk.at[h * D:(h + 1) * D, h * D:(h + 1) * D].set(head_linear[h])

    cdt = jnp.bfloat16
    qb, kb, vb = Q.astype(cdt), K.astype(cdt), V.astype(cdt)
    wblk_b = wblk.astype(cdt)
    wout_b = output_linear.astype(cdt)

    # Masks as multiplicative 0/1 keep factors (folded into qh / vh in-kernel).
    row_keep = 1.0 - KMask.reshape(B, L, 1).astype(jnp.float32)  # query rows
    col_keep = 1.0 - QMask.reshape(B, L, 1).astype(jnp.float32)  # key columns

    kernel = _make_mha_kernel(H, D)

    out = pl.pallas_call(
        kernel,
        out_shape=jax.ShapeDtypeStruct((B, L, E), jnp.float32),
        grid=(B, nq),
        in_specs=[
            pl.BlockSpec((1, TQ, E), lambda b, q: (b, q, 0)),   # Q tile
            pl.BlockSpec((1, L, E), lambda b, q: (b, 0, 0)),    # K (per batch)
            pl.BlockSpec((1, L, E), lambda b, q: (b, 0, 0)),    # V (per batch)
            pl.BlockSpec((E, E), lambda b, q: (0, 0)),          # block-diag head W
            pl.BlockSpec((E, E), lambda b, q: (0, 0)),          # output W
            pl.BlockSpec((1, TQ, 1), lambda b, q: (b, q, 0)),   # KMask keep (rows)
            pl.BlockSpec((1, L, 1), lambda b, q: (b, 0, 0)),    # QMask keep (cols)
        ],
        out_specs=pl.BlockSpec((1, TQ, E), lambda b, q: (b, q, 0)),
        scratch_shapes=[
            pltpu.VMEM((L, E), jnp.bfloat16),    # kh (persists across q tiles)
            pltpu.VMEM((L, E), jnp.bfloat16),    # vh (QMask folded in)
            pltpu.VMEM((TQ, E), jnp.bfloat16),   # per-tile context
        ],
        compiler_params=pltpu.CompilerParams(
            dimension_semantics=("parallel", "arbitrary"),
            vmem_limit_bytes=64 * 1024 * 1024),
    )(qb, kb, vb, wblk_b, wout_b, row_keep, col_keep)
    return out


def _reference(Q, K, V, QMask, KMask, head_linear, output_linear, H, L):
    # Pure-JAX f32 reference of the intended module semantics.
    B, _, E = Q.shape
    D = E // H
    split = lambda x: jnp.transpose(x.reshape(B, L, H, D), (0, 2, 1, 3))
    qh = jnp.einsum("bhld,hde->bhle", split(Q), head_linear)
    kh = jnp.einsum("bhld,hde->bhle", split(K), head_linear)
    vh = jnp.einsum("bhld,hde->bhle", split(V), head_linear)
    scores = jnp.einsum("bhqd,bhkd->bhqk", qh, kh) / jnp.sqrt(jnp.float32(D))
    scores = jnp.where(KMask, -1.0e9, scores)
    p = jax.nn.softmax(scores, axis=-1)
    p = jnp.where(QMask, 0.0, p)
    ctx = jnp.einsum("bhqk,bhkd->bhqd", p, vh)
    ctx = jnp.transpose(ctx, (0, 2, 1, 3)).reshape(B, L, E)
    return jnp.einsum("ble,ef->blf", ctx, output_linear)


if __name__ == "__main__":
    B, H, E, L = 2, 4, 32, 8
    D = E // H
    key = jax.random.PRNGKey(0)
    kq, kk, kv, kw1, kw2 = jax.random.split(key, 5)

    Q = jax.random.normal(kq, (B, L, E), dtype=jnp.float32)
    K = jax.random.normal(kk, (B, L, E), dtype=jnp.float32)
    V = jax.random.normal(kv, (B, L, E), dtype=jnp.float32)

    # Deterministic parameter init (shapes from __init__).
    head_linear = jax.random.normal(kw1, (H, D, D), dtype=jnp.float32) * 0.1
    output_linear = jax.random.normal(kw2, (E, E), dtype=jnp.float32) * 0.1

    # Padding-style masks: KMask [B,1,L,1] (masks score rows), QMask [B,1,1,L]
    # (zeroes probability columns after softmax).
    klen = jnp.array([L, L - 2])
    qlen = jnp.array([L, L - 1])
    KMask = (jnp.arange(L)[None, :] >= klen[:, None]).reshape(B, 1, L, 1)
    QMask = (jnp.arange(L)[None, :] >= qlen[:, None]).reshape(B, 1, 1, L)

    out = multi_head_attention(Q, K, V, QMask, KMask, head_linear,
                               output_linear, head_num=H, max_length=L)
    out = jax.block_until_ready(out)

    ref = _reference(Q, K, V, QMask, KMask, head_linear, output_linear, H, L)
    assert out.shape == (B, L, E) and out.dtype == jnp.float32
    # bf16 operands + approx reciprocal vs f32 reference -> looser tolerance.
    assert jnp.allclose(out, ref, rtol=2e-2, atol=2e-2)

    print("KERNEL_OK")
</pallas_src>

<mosaic_0001>
module attributes {stable_mosaic.version = 11 : i64} {
  func.func @kernel(%arg0: i32, %arg1: i32, %arg2: memref<1x8x32xbf16, #tpu.memory_space<vmem>>, %arg3: memref<1x8x32xbf16, #tpu.memory_space<vmem>>, %arg4: memref<1x8x32xbf16, #tpu.memory_space<vmem>>, %arg5: memref<32x32xbf16, #tpu.memory_space<vmem>>, %arg6: memref<32x32xbf16, #tpu.memory_space<vmem>>, %arg7: memref<1x8x1xf32, #tpu.memory_space<vmem>>, %arg8: memref<1x8x1xf32, #tpu.memory_space<vmem>>, %arg9: memref<1x8x32xf32, #tpu.memory_space<vmem>>, %arg10: memref<8x32xbf16, #tpu.memory_space<vmem>>, %arg11: memref<8x32xbf16, #tpu.memory_space<vmem>>, %arg12: memref<8x32xbf16, #tpu.memory_space<vmem>>) attributes {dimension_semantics = [#tpu.dimension_semantics<parallel>, #tpu.dimension_semantics<arbitrary>], iteration_bounds = array<i64: 2, 1>, scalar_prefetch = 0 : i64, scratch_operands = 3 : i64, tpu.core_type = #tpu.core_type<tc>, window_params = [{transform_indices = @transform_0, window_bounds = array<i64: 1, 8, 32>}, {transform_indices = @transform_1, window_bounds = array<i64: 1, 8, 32>}, {transform_indices = @transform_2, window_bounds = array<i64: 1, 8, 32>}, {pipeline_mode = #tpu.pipeline_mode<synchronous>, transform_indices = @transform_3, window_bounds = array<i64: 32, 32>}, {pipeline_mode = #tpu.pipeline_mode<synchronous>, transform_indices = @transform_4, window_bounds = array<i64: 32, 32>}, {transform_indices = @transform_5, window_bounds = array<i64: 1, 8, 1>}, {transform_indices = @transform_6, window_bounds = array<i64: 1, 8, 1>}, {transform_indices = @transform_7, window_bounds = array<i64: 1, 8, 32>}]} {
    %c0_i32 = arith.constant 0 : i32
    %0 = arith.cmpi eq, %arg1, %c0_i32 : i32
    %1 = arith.extui %0 : i1 to i32
    %c0_i32_0 = arith.constant 0 : i32
    %2 = arith.cmpi ne, %1, %c0_i32_0 : i32
    scf.if %2 {
      %c0_54 = arith.constant 0 : index
      %c0_55 = arith.constant 0 : index
      %92 = vector.load %arg5[%c0_54, %c0_55] : memref<32x32xbf16, #tpu.memory_space<vmem>>, vector<32x32xbf16>
      %c0_56 = arith.constant 0 : index
      %c0_57 = arith.constant 0 : index
      %c0_58 = arith.constant 0 : index
      %93 = vector.load %arg3[%c0_56, %c0_57, %c0_58] : memref<1x8x32xbf16, #tpu.memory_space<vmem>>, vector<1x8x32xbf16>
      %94 = vector.shape_cast %93 : vector<1x8x32xbf16> to vector<8x32xbf16>
      %cst_59 = arith.constant dense<0.000000e+00> : vector<8x32xf32>
      %95 = tpu.matmul %94, %92, %cst_59 {dimension_numbers = #tpu.dot_dimension_numbers<[1], [0], [0], [1], [0, 0, 1, 1], [], []>} : vector<8x32xbf16>, vector<32x32xbf16>, vector<8x32xf32> -> vector<8x32xf32>
      %96 = arith.truncf %95 : vector<8x32xf32> to vector<8x32xbf16>
      %c0_60 = arith.constant 0 : index
      %c0_61 = arith.constant 0 : index
      %97 = vector.load %arg10[%c0_60, %c0_61] : memref<8x32xbf16, #tpu.memory_space<vmem>>, vector<8x32xbf16>
      tpu.vector_store %arg10[%c0_60, %c0_61], %96 {strides = array<i32>} : memref<8x32xbf16, #tpu.memory_space<vmem>>, vector<8x32xbf16>,
      %c0_62 = arith.constant 0 : index
      %c0_63 = arith.constant 0 : index
      %c0_64 = arith.constant 0 : index
      %98 = vector.load %arg4[%c0_62, %c0_63, %c0_64] : memref<1x8x32xbf16, #tpu.memory_space<vmem>>, vector<1x8x32xbf16>
      %99 = vector.shape_cast %98 : vector<1x8x32xbf16> to vector<8x32xbf16>
      %cst_65 = arith.constant dense<0.000000e+00> : vector<8x32xf32>
      %100 = tpu.matmul %99, %92, %cst_65 {dimension_numbers = #tpu.dot_dimension_numbers<[1], [0], [0], [1], [0, 0, 1, 1], [], []>} : vector<8x32xbf16>, vector<32x32xbf16>, vector<8x32xf32> -> vector<8x32xf32>
      %c0_66 = arith.constant 0 : index
      %c0_67 = arith.constant 0 : index
      %c0_68 = arith.constant 0 : index
      %101 = vector.load %arg8[%c0_66, %c0_67, %c0_68] : memref<1x8x1xf32, #tpu.memory_space<vmem>>, vector<1x8x1xf32>
      %102 = vector.shape_cast %101 : vector<1x8x1xf32> to vector<8x1xf32>
      %103 = vector.broadcast %102 : vector<8x1xf32> to vector<8x32xf32>
      %104 = arith.mulf %100, %103 : vector<8x32xf32>
      %105 = arith.truncf %104 : vector<8x32xf32> to vector<8x32xbf16>
      %c0_69 = arith.constant 0 : index
      %c0_70 = arith.constant 0 : index
      %106 = vector.load %arg11[%c0_69, %c0_70] : memref<8x32xbf16, #tpu.memory_space<vmem>>, vector<8x32xbf16>
      tpu.vector_store %arg11[%c0_69, %c0_70], %105 {strides = array<i32>} : memref<8x32xbf16, #tpu.memory_space<vmem>>, vector<8x32xbf16>,
    } else {
    }
    %c0 = arith.constant 0 : index
    %c0_1 = arith.constant 0 : index
    %c0_2 = arith.constant 0 : index
    %3 = vector.load %arg2[%c0, %c0_1, %c0_2] : memref<1x8x32xbf16, #tpu.memory_space<vmem>>, vector<1x8x32xbf16>
    %4 = vector.shape_cast %3 : vector<1x8x32xbf16> to vector<8x32xbf16>
    %c0_3 = arith.constant 0 : index
    %c0_4 = arith.constant 0 : index
    %5 = vector.load %arg5[%c0_3, %c0_4] : memref<32x32xbf16, #tpu.memory_space<vmem>>, vector<32x32xbf16>
    %cst = arith.constant dense<0.000000e+00> : vector<8x32xf32>
    %6 = tpu.matmul %4, %5, %cst {dimension_numbers = #tpu.dot_dimension_numbers<[1], [0], [0], [1], [0, 0, 1, 1], [], []>} : vector<8x32xbf16>, vector<32x32xbf16>, vector<8x32xf32> -> vector<8x32xf32>
    %c0_5 = arith.constant 0 : index
    %c0_6 = arith.constant 0 : index
    %c0_7 = arith.constant 0 : index
    %7 = vector.load %arg7[%c0_5, %c0_6, %c0_7] : memref<1x8x1xf32, #tpu.memory_space<vmem>>, vector<1x8x1xf32>
    %8 = vector.shape_cast %7 : vector<1x8x1xf32> to vector<8x1xf32>
    %cst_8 = arith.constant 0.353553385 : f32
    %9 = vector.broadcast %cst_8 : f32 to vector<8x1xf32>
    %10 = arith.mulf %9, %8 : vector<8x1xf32>
    %11 = vector.broadcast %10 : vector<8x1xf32> to vector<8x32xf32>
    %12 = arith.mulf %6, %11 : vector<8x32xf32>
    %13 = arith.truncf %12 : vector<8x32xf32> to vector<8x32xbf16>
    %14 = vector.extract_strided_slice %13 {offsets = [0, 0], sizes = [8, 8], strides = [1, 1]} : vector<8x32xbf16> to vector<8x8xbf16>
    %c0_9 = arith.constant 0 : index
    %c0_10 = arith.constant 0 : index
    %15 = vector.load %arg10[%c0_9, %c0_10] : memref<8x32xbf16, #tpu.memory_space<vmem>>, vector<8x8xbf16>
    %cst_11 = arith.constant dense<0.000000e+00> : vector<8x8xf32>
    %16 = tpu.matmul %14, %15, %cst_11 {dimension_numbers = #tpu.dot_dimension_numbers<[1], [1], [0], [0], [0, 0, 1, 0], [], []>} : vector<8x8xbf16>, vector<8x8xbf16>, vector<8x8xf32> -> vector<8x8xf32>
    %cst_12 = arith.constant dense<0xFF800000> : vector<8xf32>
    %17 = vector.multi_reduction <maximumf>, %16, %cst_12 [1] : vector<8x8xf32> to vector<8xf32>
    %18 = vector.shape_cast %17 : vector<8xf32> to vector<8x1xf32>
    %19 = vector.broadcast %18 : vector<8x1xf32> to vector<8x8xf32>
    %20 = arith.subf %16, %19 : vector<8x8xf32>
    %21 = math.exp %20 : vector<8x8xf32>
    %cst_13 = arith.constant dense<0.000000e+00> : vector<8xf32>
    %22 = vector.multi_reduction <add>, %21, %cst_13 [1] : vector<8x8xf32> to vector<8xf32>
    %23 = vector.shape_cast %22 : vector<8xf32> to vector<8x1xf32>
    %24 = tpu.reciprocal %23 {approx = true} : vector<8x1xf32> -> vector<8x1xf32>
    %25 = arith.truncf %21 : vector<8x8xf32> to vector<8x8xbf16>
    %c0_14 = arith.constant 0 : index
    %c0_15 = arith.constant 0 : index
    %26 = vector.load %arg11[%c0_14, %c0_15] : memref<8x32xbf16, #tpu.memory_space<vmem>>, vector<8x8xbf16>
    %cst_16 = arith.constant dense<0.000000e+00> : vector<8x8xf32>
    %27 = tpu.matmul %25, %26, %cst_16 {dimension_numbers = #tpu.dot_dimension_numbers<[1], [0], [0], [1], [0, 0, 1, 1], [], []>} : vector<8x8xbf16>, vector<8x8xbf16>, vector<8x8xf32> -> vector<8x8xf32>
    %28 = vector.broadcast %24 : vector<8x1xf32> to vector<8x8xf32>
    %29 = arith.mulf %27, %28 : vector<8x8xf32>
    %30 = arith.truncf %29 : vector<8x8xf32> to vector<8x8xbf16>
    %c0_17 = arith.constant 0 : index
    %c0_18 = arith.constant 0 : index
    %31 = vector.load %arg12[%c0_17, %c0_18] : memref<8x32xbf16, #tpu.memory_space<vmem>>, vector<8x8xbf16>
    tpu.vector_store %arg12[%c0_17, %c0_18], %30 {strides = array<i32>} : memref<8x32xbf16, #tpu.memory_space<vmem>>, vector<8x8xbf16>,
    %32 = vector.extract_strided_slice %13 {offsets = [0, 8], sizes = [8, 8], strides = [1, 1]} : vector<8x32xbf16> to vector<8x8xbf16>
    %c0_19 = arith.constant 0 : index
    %c8 = arith.constant 8 : index
    %33 = vector.load %arg10[%c0_19, %c8] : memref<8x32xbf16, #tpu.memory_space<vmem>>, vector<8x8xbf16>
    %cst_20 = arith.constant dense<0.000000e+00> : vector<8x8xf32>
    %34 = tpu.matmul %32, %33, %cst_20 {dimension_numbers = #tpu.dot_dimension_numbers<[1], [1], [0], [0], [0, 0, 1, 0], [], []>} : vector<8x8xbf16>, vector<8x8xbf16>, vector<8x8xf32> -> vector<8x8xf32>
    %cst_21 = arith.constant dense<0xFF800000> : vector<8xf32>
    %35 = vector.multi_reduction <maximumf>, %34, %cst_21 [1] : vector<8x8xf32> to vector<8xf32>
    %36 = vector.shape_cast %35 : vector<8xf32> to vector<8x1xf32>
    %37 = vector.broadcast %36 : vector<8x1xf32> to vector<8x8xf32>
    %38 = arith.subf %34, %37 : vector<8x8xf32>
    %39 = math.exp %38 : vector<8x8xf32>
    %cst_22 = arith.constant dense<0.000000e+00> : vector<8xf32>
    %40 = vector.multi_reduction <add>, %39, %cst_22 [1] : vector<8x8xf32> to vector<8xf32>
    %41 = vector.shape_cast %40 : vector<8xf32> to vector<8x1xf32>
    %42 = tpu.reciprocal %41 {approx = true} : vector<8x1xf32> -> vector<8x1xf32>
    %43 = arith.truncf %39 : vector<8x8xf32> to vector<8x8xbf16>
    %c0_23 = arith.constant 0 : index
    %c8_24 = arith.constant 8 : index
    %44 = vector.load %arg11[%c0_23, %c8_24] : memref<8x32xbf16, #tpu.memory_space<vmem>>, vector<8x8xbf16>
    %cst_25 = arith.constant dense<0.000000e+00> : vector<8x8xf32>
    %45 = tpu.matmul %43, %44, %cst_25 {dimension_numbers = #tpu.dot_dimension_numbers<[1], [0], [0], [1], [0, 0, 1, 1], [], []>} : vector<8x8xbf16>, vector<8x8xbf16>, vector<8x8xf32> -> vector<8x8xf32>
    %46 = vector.broadcast %42 : vector<8x1xf32> to vector<8x8xf32>
    %47 = arith.mulf %45, %46 : vector<8x8xf32>
    %48 = arith.truncf %47 : vector<8x8xf32> to vector<8x8xbf16>
    %c0_26 = arith.constant 0 : index
    %c8_27 = arith.constant 8 : index
    %49 = vector.load %arg12[%c0_26, %c8_27] : memref<8x32xbf16, #tpu.memory_space<vmem>>, vector<8x8xbf16>
    tpu.vector_store %arg12[%c0_26, %c8_27], %48 {strides = array<i32>} : memref<8x32xbf16, #tpu.memory_space<vmem>>, vector<8x8xbf16>,
    %50 = vector.extract_strided_slice %13 {offsets = [0, 16], sizes = [8, 8], strides = [1, 1]} : vector<8x32xbf16> to vector<8x8xbf16>
    %c0_28 = arith.constant 0 : index
    %c16 = arith.constant 16 : index
    %51 = vector.load %arg10[%c0_28, %c16] : memref<8x32xbf16, #tpu.memory_space<vmem>>, vector<8x8xbf16>
    %cst_29 = arith.constant dense<0.000000e+00> : vector<8x8xf32>
    %52 = tpu.matmul %50, %51, %cst_29 {dimension_numbers = #tpu.dot_dimension_numbers<[1], [1], [0], [0], [0, 0, 1, 0], [], []>} : vector<8x8xbf16>, vector<8x8xbf16>, vector<8x8xf32> -> vector<8x8xf32>
    %cst_30 = arith.constant dense<0xFF800000> : vector<8xf32>
    %53 = vector.multi_reduction <maximumf>, %52, %cst_30 [1] : vector<8x8xf32> to vector<8xf32>
    %54 = vector.shape_cast %53 : vector<8xf32> to vector<8x1xf32>
    %55 = vector.broadcast %54 : vector<8x1xf32> to vector<8x8xf32>
    %56 = arith.subf %52, %55 : vector<8x8xf32>
    %57 = math.exp %56 : vector<8x8xf32>
    %cst_31 = arith.constant dense<0.000000e+00> : vector<8xf32>
    %58 = vector.multi_reduction <add>, %57, %cst_31 [1] : vector<8x8xf32> to vector<8xf32>
    %59 = vector.shape_cast %58 : vector<8xf32> to vector<8x1xf32>
    %60 = tpu.reciprocal %59 {approx = true} : vector<8x1xf32> -> vector<8x1xf32>
    %61 = arith.truncf %57 : vector<8x8xf32> to vector<8x8xbf16>
    %c0_32 = arith.constant 0 : index
    %c16_33 = arith.constant 16 : index
    %62 = vector.load %arg11[%c0_32, %c16_33] : memref<8x32xbf16, #tpu.memory_space<vmem>>, vector<8x8xbf16>
    %cst_34 = arith.constant dense<0.000000e+00> : vector<8x8xf32>
    %63 = tpu.matmul %61, %62, %cst_34 {dimension_numbers = #tpu.dot_dimension_numbers<[1], [0], [0], [1], [0, 0, 1, 1], [], []>} : vector<8x8xbf16>, vector<8x8xbf16>, vector<8x8xf32> -> vector<8x8xf32>
    %64 = vector.broadcast %60 : vector<8x1xf32> to vector<8x8xf32>
    %65 = arith.mulf %63, %64 : vector<8x8xf32>
    %66 = arith.truncf %65 : vector<8x8xf32> to vector<8x8xbf16>
    %c0_35 = arith.constant 0 : index
    %c16_36 = arith.constant 16 : index
    %67 = vector.load %arg12[%c0_35, %c16_36] : memref<8x32xbf16, #tpu.memory_space<vmem>>, vector<8x8xbf16>
    tpu.vector_store %arg12[%c0_35, %c16_36], %66 {strides = array<i32>} : memref<8x32xbf16, #tpu.memory_space<vmem>>, vector<8x8xbf16>,
    %68 = vector.extract_strided_slice %13 {offsets = [0, 24], sizes = [8, 8], strides = [1, 1]} : vector<8x32xbf16> to vector<8x8xbf16>
    %c0_37 = arith.constant 0 : index
    %c24 = arith.constant 24 : index
    %69 = vector.load %arg10[%c0_37, %c24] : memref<8x32xbf16, #tpu.memory_space<vmem>>, vector<8x8xbf16>
    %cst_38 = arith.constant dense<0.000000e+00> : vector<8x8xf32>
    %70 = tpu.matmul %68, %69, %cst_38 {dimension_numbers = #tpu.dot_dimension_numbers<[1], [1], [0], [0], [0, 0, 1, 0], [], []>} : vector<8x8xbf16>, vector<8x8xbf16>, vector<8x8xf32> -> vector<8x8xf32>
    %cst_39 = arith.constant dense<0xFF800000> : vector<8xf32>
    %71 = vector.multi_reduction <maximumf>, %70, %cst_39 [1] : vector<8x8xf32> to vector<8xf32>
    %72 = vector.shape_cast %71 : vector<8xf32> to vector<8x1xf32>
    %73 = vector.broadcast %72 : vector<8x1xf32> to vector<8x8xf32>
    %74 = arith.subf %70, %73 : vector<8x8xf32>
    %75 = math.exp %74 : vector<8x8xf32>
    %cst_40 = arith.constant dense<0.000000e+00> : vector<8xf32>
    %76 = vector.multi_reduction <add>, %75, %cst_40 [1] : vector<8x8xf32> to vector<8xf32>
    %77 = vector.shape_cast %76 : vector<8xf32> to vector<8x1xf32>
    %78 = tpu.reciprocal %77 {approx = true} : vector<8x1xf32> -> vector<8x1xf32>
    %79 = arith.truncf %75 : vector<8x8xf32> to vector<8x8xbf16>
    %c0_41 = arith.constant 0 : index
    %c24_42 = arith.constant 24 : index
    %80 = vector.load %arg11[%c0_41, %c24_42] : memref<8x32xbf16, #tpu.memory_space<vmem>>, vector<8x8xbf16>
    %cst_43 = arith.constant dense<0.000000e+00> : vector<8x8xf32>
    %81 = tpu.matmul %79, %80, %cst_43 {dimension_numbers = #tpu.dot_dimension_numbers<[1], [0], [0], [1], [0, 0, 1, 1], [], []>} : vector<8x8xbf16>, vector<8x8xbf16>, vector<8x8xf32> -> vector<8x8xf32>
    %82 = vector.broadcast %78 : vector<8x1xf32> to vector<8x8xf32>
    %83 = arith.mulf %81, %82 : vector<8x8xf32>
    %84 = arith.truncf %83 : vector<8x8xf32> to vector<8x8xbf16>
    %c0_44 = arith.constant 0 : index
    %c24_45 = arith.constant 24 : index
    %85 = vector.load %arg12[%c0_44, %c24_45] : memref<8x32xbf16, #tpu.memory_space<vmem>>, vector<8x8xbf16>
    tpu.vector_store %arg12[%c0_44, %c24_45], %84 {strides = array<i32>} : memref<8x32xbf16, #tpu.memory_space<vmem>>, vector<8x8xbf16>,
    %c0_46 = arith.constant 0 : index
    %c0_47 = arith.constant 0 : index
    %86 = vector.load %arg12[%c0_46, %c0_47] : memref<8x32xbf16, #tpu.memory_space<vmem>>, vector<8x32xbf16>
    %c0_48 = arith.constant 0 : index
    %c0_49 = arith.constant 0 : index
    %87 = vector.load %arg6[%c0_48, %c0_49] : memref<32x32xbf16, #tpu.memory_space<vmem>>, vector<32x32xbf16>
    %cst_50 = arith.constant dense<0.000000e+00> : vector<8x32xf32>
    %88 = tpu.matmul %86, %87, %cst_50 {dimension_numbers = #tpu.dot_dimension_numbers<[1], [0], [0], [1], [0, 0, 1, 1], [], []>} : vector<8x32xbf16>, vector<32x32xbf16>, vector<8x32xf32> -> vector<8x32xf32>
    %c0_51 = arith.constant 0 : index
    %c0_52 = arith.constant 0 : index
    %c0_53 = arith.constant 0 : index
    %89 = vector.load %arg9[%c0_51, %c0_52, %c0_53] : memref<1x8x32xf32, #tpu.memory_space<vmem>>, vector<1x8x32xf32>
    %90 = vector.shape_cast %89 : vector<1x8x32xf32> to vector<8x32xf32>
    %91 = vector.shape_cast %88 : vector<8x32xf32> to vector<1x8x32xf32>
    tpu.vector_store %arg9[%c0_51, %c0_52, %c0_53], %91 {strides = array<i32>} : memref<1x8x32xf32, #tpu.memory_space<vmem>>, vector<1x8x32xf32>,
    return
  }
  func.func @transform_0(%arg0: i32, %arg1: i32) -> (i32, i32, i32) {
    %c0_i32 = arith.constant 0 : i32
    %c0_i32_0 = arith.constant 0 : i32
    return %arg0, %arg1, %c0_i32 : i32, i32, i32
  }
  func.func @transform_1(%arg0: i32, %arg1: i32) -> (i32, i32, i32) {
    %c0_i32 = arith.constant 0 : i32
    %c0_i32_0 = arith.constant 0 : i32
    %c0_i32_1 = arith.constant 0 : i32
    return %arg0, %c0_i32, %c0_i32_0 : i32, i32, i32
  }
  func.func @transform_2(%arg0: i32, %arg1: i32) -> (i32, i32, i32) {
    %c0_i32 = arith.constant 0 : i32
    %c0_i32_0 = arith.constant 0 : i32
    %c0_i32_1 = arith.constant 0 : i32
    return %arg0, %c0_i32, %c0_i32_0 : i32, i32, i32
  }
  func.func @transform_3(%arg0: i32, %arg1: i32) -> (i32, i32) {
    %c0_i32 = arith.constant 0 : i32
    %c0_i32_0 = arith.constant 0 : i32
    %c0_i32_1 = arith.constant 0 : i32
    return %c0_i32, %c0_i32_0 : i32, i32
  }
  func.func @transform_4(%arg0: i32, %arg1: i32) -> (i32, i32) {
    %c0_i32 = arith.constant 0 : i32
    %c0_i32_0 = arith.constant 0 : i32
    %c0_i32_1 = arith.constant 0 : i32
    return %c0_i32, %c0_i32_0 : i32, i32
  }
  func.func @transform_5(%arg0: i32, %arg1: i32) -> (i32, i32, i32) {
    %c0_i32 = arith.constant 0 : i32
    %c0_i32_0 = arith.constant 0 : i32
    return %arg0, %arg1, %c0_i32 : i32, i32, i32
  }
  func.func @transform_6(%arg0: i32, %arg1: i32) -> (i32, i32, i32) {
    %c0_i32 = arith.constant 0 : i32
    %c0_i32_0 = arith.constant 0 : i32
    %c0_i32_1 = arith.constant 0 : i32
    return %arg0, %c0_i32, %c0_i32_0 : i32, i32, i32
  }
  func.func @transform_7(%arg0: i32, %arg1: i32) -> (i32, i32, i32) {
    %c0_i32 = arith.constant 0 : i32
    %c0_i32_0 = arith.constant 0 : i32
    return %arg0, %arg1, %c0_i32 : i32, i32, i32
  }
}

</mosaic_0001>

<llo_original>
// kernel: tpu_custom_call.1
$region0: #{tpu_custom_call.1}
  #allocation0 [shape = 'u32[]', space=smem, size = 0x4, offset = 0x4, fixed_abs, tag = 'smem constant byte address 0x4 - core index']
  #allocation1 [shape = 'u32[144,128]{1,0:T(1,128)}', space=vmem, size = 0x12000, scoped, tag = 'internal scratch']
  #allocation2 [shape = 'bf16[8,32]{1,0:T(8,128)(2,1)}', space=vmem, size = 0x800, scoped, tag = 'scratch operand']
  #allocation3 [shape = 'bf16[8,32]{1,0:T(8,128)(2,1)}', space=vmem, size = 0x800, scoped, tag = 'scratch operand']
  #allocation4 [shape = 'bf16[8,32]{1,0:T(8,128)(2,1)}', space=vmem, size = 0x800, scoped, tag = 'scratch operand']
  %s0 = inlined_call_operand.hbm [shape: bf16[2,8,32], index: 0, kind: input, shape index: {}]
  %s1 = inlined_call_operand.hbm [shape: bf16[2,8,32], index: 1, kind: input, shape index: {}]
  %s2 = inlined_call_operand.hbm [shape: bf16[2,8,32], index: 2, kind: input, shape index: {}]
  %s3 = inlined_call_operand.vmem [shape: bf16[32,32], index: 3, kind: input, shape index: {}]
  %s4 = inlined_call_operand.vmem [shape: bf16[32,32], index: 4, kind: input, shape index: {}]
  %s5 = inlined_call_operand.vmem [shape: f32[2,8,1], index: 5, kind: input, shape index: {}]
  %s6 = inlined_call_operand.vmem [shape: f32[2,8,1], index: 6, kind: input, shape index: {}]
  %s7 = inlined_call_operand.hbm [shape: f32[2,8,32], index: 7, kind: output, shape index: {}]
  %s8 = sld [smem:[#allocation0]]
  $region77: #{tpu_custom_call.1} parent=0
    _
  %s10 = ssub.s32 1, %s8
  %s11 = scalar_select 0, %s10, %s8
  $region1: #{tpu_custom_call.1} parent=0
    #allocation5 [shape = 'u8[4096]{0}', space=vmem, size = 0x1000, scoped, tag = 'input window, operand 0']
    #allocation6 [shape = 's32[2]{0}', space=sflag, size = 0x8, scoped, tag = 'scoped memory for tpu_custom_call.1']
    #allocation7 [shape = 's32[2]{0}', space=sflag, size = 0x8, scoped, tag = 'scoped memory for tpu_custom_call.1']
    #allocation8 [shape = 'u8[4096]{0}', space=vmem, size = 0x1000, scoped, tag = 'input window, operand 1']
    #allocation9 [shape = 's32[2]{0}', space=sflag, size = 0x8, scoped, tag = 'scoped memory for tpu_custom_call.1']
    #allocation10 [shape = 'u8[4096]{0}', space=vmem, size = 0x1000, scoped, tag = 'input window, operand 2']
    #allocation11 [shape = 'u8[8192]{0}', space=vmem, size = 0x2000, scoped, tag = 'output window, operand 0']
    %12 = vsyncpa [#allocation6], 0
    %s13 = scalar_lea.sflag [#allocation6], 1
    %14 = vsyncpa %s13, 0
    %15 = vsyncpa [#allocation9], 0
    %s16 = scalar_lea.sflag [#allocation9], 1
    %17 = vsyncpa %s16, 0
    %18 = vsyncpa [#allocation7], 0
    %s19 = scalar_lea.sflag [#allocation7], 1
    %20 = vsyncpa %s19, 0
    loop: start=0, step=1, limit=4
    $region2: #{tpu_custom_call.1} parent=1 // loop_pre_header
      _
    $region3: #{tpu_custom_call.1} parent=1 // loop_header
      %s22 = sphi 0, %s26
      %p23 = scmp.ge.s32.totalorder %s22, 4
      %s29 = sphi 0, %s41
      %s30 = sphi 0, %s37
      %s31 = sphi 0, %s29
      %s32 = sphi 0, %s30
      %s33 = sphi 0, %s31
      %s34 = sphi 0, %s32
      %s46 = sphi 0, %s48
      %s49 = sphi 0, %s46
      %s50 = sphi 0, %s49
      %s66 = sphi 0, %s50
      %s72 = sphi 0, %s74
      %s75 = sphi 0, %s72
      %s76 = sphi 0, %s75
      %s92 = sphi 0, %s76
      %s98 = sphi 0, %s100
      %s101 = sphi 0, %s98
      %s102 = sphi 0, %s101
      %s118 = sphi 0, %s102
      %s122 = sphi 0, %s122
      %s124 = sphi 0, %s122
      %s125 = sphi 0, %s124
      %s139 = sphi 0, %s125
      %s143 = sphi 0, %s143
      %s145 = sphi 0, %s143
      %s146 = sphi 0, %s145
      %s160 = sphi 0, %s146
      %s168 = sphi 0, %s170
      %s171 = sphi 0, %s168
      %s172 = sphi 0, %s171
      %s188 = sphi 0, %s172
      %s194 = sphi 0, %s196
      %s197 = sphi 0, %s194
      %s198 = sphi 0, %s197
      %s214 = sphi 0, %s198
      %s222 = sphi 0, %s224
      %s225 = sphi 0, %s222
      %s226 = sphi 0, %s225
      %s242 = sphi 0, %s226
    $region4: #{tpu_custom_call.1} parent=1 // loop_header_branch
      %25 = sbr.rel (%p23) target = $region8
    $region5: #{tpu_custom_call.1} parent=1 // loop_body
      %s27 = ssub.s32 %s22, 1
      %s28 = ssub.s32 %s22, 2
      %s35 = sadd.s32 1, %s30
      %p36 = scmp.ge.s32.totalorder %s35, 1
      %s37 = scalar_select %p36, 0, %s35
      %s38 = sadd.s32 1, %s29
      %s39 = scalar_select %p36, %s38, %s29
      %p40 = scmp.ge.s32.totalorder %s39, 2
      %s41 = scalar_select %p40, 0, %s39
      %s42 = ssub.s32 %s29, %s41
      %s43 = ssub.s32 %s30, %s37
      %s44 = sor.u32 %s42, %s43
      %p45 = scmp.eq.s32.totalorder %s44, 0
      %s47 = sadd.s32 %s46, 1
      %s48 = scalar_select %p45, %s46, %s47
      %p51 = pneg %p45
      %p52 = scmp.eq.s32.totalorder %s22, 1
      %p53 = por %p51, %p52
      %p54 = scmp.ne.s32.totalorder %s46, %s49
      %p55 = scmp.eq.s32.totalorder %s22, 0
      %p56 = por %p54, %p55
      %p57 = scmp.ne.s32.totalorder %s46, %s49
      %p58 = scmp.eq.s32.totalorder %s27, 1
      %p59 = por %p57, %p58
      %p60 = scmp.ne.s32.totalorder %s49, %s50
      %p61 = scmp.eq.s32.totalorder %s27, 0
      %p62 = por %p60, %p61
      %p63 = scmp.ne.s32.totalorder %s49, %s50
      %p64 = scmp.eq.s32.totalorder %s28, 1
      %p65 = por %p63, %p64
      %p67 = scmp.ne.s32.totalorder %s50, %s66
      %p68 = scmp.eq.s32.totalorder %s28, 0
      %p69 = por %p67, %p68
      %s70 = ssub.s32 %s29, %s41
      %p71 = scmp.eq.s32.totalorder %s70, 0
      %s73 = sadd.s32 %s72, 1
      %s74 = scalar_select %p71, %s72, %s73
      %p77 = pneg %p71
      %p78 = scmp.eq.s32.totalorder %s22, 1
      %p79 = por %p77, %p78
      %p80 = scmp.ne.s32.totalorder %s72, %s75
      %p81 = scmp.eq.s32.totalorder %s22, 0
      %p82 = por %p80, %p81
      %p83 = scmp.ne.s32.totalorder %s72, %s75
      %p84 = scmp.eq.s32.totalorder %s27, 1
      %p85 = por %p83, %p84
      %p86 = scmp.ne.s32.totalorder %s75, %s76
      %p87 = scmp.eq.s32.totalorder %s27, 0
      %p88 = por %p86, %p87
      %p89 = scmp.ne.s32.totalorder %s75, %s76
      %p90 = scmp.eq.s32.totalorder %s28, 1
      %p91 = por %p89, %p90
      %p93 = scmp.ne.s32.totalorder %s76, %s92
      %p94 = scmp.eq.s32.totalorder %s28, 0
      %p95 = por %p93, %p94
      %s96 = ssub.s32 %s29, %s41
      %p97 = scmp.eq.s32.totalorder %s96, 0
      %s99 = sadd.s32 %s98, 1
      %s100 = scalar_select %p97, %s98, %s99
      %p103 = pneg %p97
      %p104 = scmp.eq.s32.totalorder %s22, 1
      %p105 = por %p103, %p104
      %p106 = scmp.ne.s32.totalorder %s98, %s101
      %p107 = scmp.eq.s32.totalorder %s22, 0
      %p108 = por %p106, %p107
      %p109 = scmp.ne.s32.totalorder %s98, %s101
      %p110 = scmp.eq.s32.totalorder %s27, 1
      %p111 = por %p109, %p110
      %p112 = scmp.ne.s32.totalorder %s101, %s102
      %p113 = scmp.eq.s32.totalorder %s27, 0
      %p114 = por %p112, %p113
      %p115 = scmp.ne.s32.totalorder %s101, %s102
      %p116 = scmp.eq.s32.totalorder %s28, 1
      %p117 = por %p115, %p116
      %p119 = scmp.ne.s32.totalorder %s102, %s118
      %p120 = scmp.eq.s32.totalorder %s28, 0
      %p121 = por %p119, %p120
      %s123 = sadd.s32 %s122, 1
      %p126 = scmp.eq.s32.totalorder %s22, 1
      %p127 = scmp.ne.s32.totalorder %s122, %s124
      %p128 = scmp.eq.s32.totalorder %s22, 0
      %p129 = por %p127, %p128
      %p130 = scmp.ne.s32.totalorder %s122, %s124
      %p131 = scmp.eq.s32.totalorder %s27, 1
      %p132 = por %p130, %p131
      %p133 = scmp.ne.s32.totalorder %s124, %s125
      %p134 = scmp.eq.s32.totalorder %s27, 0
      %p135 = por %p133, %p134
      %p136 = scmp.ne.s32.totalorder %s124, %s125
      %p137 = scmp.eq.s32.totalorder %s28, 1
      %p138 = por %p136, %p137
      %p140 = scmp.ne.s32.totalorder %s125, %s139
      %p141 = scmp.eq.s32.totalorder %s28, 0
      %p142 = por %p140, %p141
      %s144 = sadd.s32 %s143, 1
      %p147 = scmp.eq.s32.totalorder %s22, 1
      %p148 = scmp.ne.s32.totalorder %s143, %s145
      %p149 = scmp.eq.s32.totalorder %s22, 0
      %p150 = por %p148, %p149
      %p151 = scmp.ne.s32.totalorder %s143, %s145
      %p152 = scmp.eq.s32.totalorder %s27, 1
      %p153 = por %p151, %p152
      %p154 = scmp.ne.s32.totalorder %s145, %s146
      %p155 = scmp.eq.s32.totalorder %s27, 0
      %p156 = por %p154, %p155
      %p157 = scmp.ne.s32.totalorder %s145, %s146
      %p158 = scmp.eq.s32.totalorder %s28, 1
      %p159 = por %p157, %p158
      %p161 = scmp.ne.s32.totalorder %s146, %s160
      %p162 = scmp.eq.s32.totalorder %s28, 0
      %p163 = por %p161, %p162
      %s164 = ssub.s32 %s29, %s41
      %s165 = ssub.s32 %s30, %s37
      %s166 = sor.u32 %s164, %s165
      %p167 = scmp.eq.s32.totalorder %s166, 0
      %s169 = sadd.s32 %s168, 1
      %s170 = scalar_select %p167, %s168, %s169
      %p173 = pneg %p167
      %p174 = scmp.eq.s32.totalorder %s22, 1
      %p175 = por %p173, %p174
      %p176 = scmp.ne.s32.totalorder %s168, %s171
      %p177 = scmp.eq.s32.totalorder %s22, 0
      %p178 = por %p176, %p177
      %p179 = scmp.ne.s32.totalorder %s168, %s171
      %p180 = scmp.eq.s32.totalorder %s27, 1
      %p181 = por %p179, %p180
      %p182 = scmp.ne.s32.totalorder %s171, %s172
      %p183 = scmp.eq.s32.totalorder %s27, 0
      %p184 = por %p182, %p183
      %p185 = scmp.ne.s32.totalorder %s171, %s172
      %p186 = scmp.eq.s32.totalorder %s28, 1
      %p187 = por %p185, %p186
      %p189 = scmp.ne.s32.totalorder %s172, %s188
      %p190 = scmp.eq.s32.totalorder %s28, 0
      %p191 = por %p189, %p190
      %s192 = ssub.s32 %s29, %s41
      %p193 = scmp.eq.s32.totalorder %s192, 0
      %s195 = sadd.s32 %s194, 1
      %s196 = scalar_select %p193, %s194, %s195
      %p199 = pneg %p193
      %p200 = scmp.eq.s32.totalorder %s22, 1
      %p201 = por %p199, %p200
      %p202 = scmp.ne.s32.totalorder %s194, %s197
      %p203 = scmp.eq.s32.totalorder %s22, 0
      %p204 = por %p202, %p203
      %p205 = scmp.ne.s32.totalorder %s194, %s197
      %p206 = scmp.eq.s32.totalorder %s27, 1
      %p207 = por %p205, %p206
      %p208 = scmp.ne.s32.totalorder %s197, %s198
      %p209 = scmp.eq.s32.totalorder %s27, 0
      %p210 = por %p208, %p209
      %p211 = scmp.ne.s32.totalorder %s197, %s198
      %p212 = scmp.eq.s32.totalorder %s28, 1
      %p213 = por %p211, %p212
      %p215 = scmp.ne.s32.totalorder %s198, %s214
      %p216 = scmp.eq.s32.totalorder %s28, 0
      %p217 = por %p215, %p216
      %s218 = ssub.s32 %s29, %s41
      %s219 = ssub.s32 %s30, %s37
      %s220 = sor.u32 %s218, %s219
      %p221 = scmp.eq.s32.totalorder %s220, 0
      %s223 = sadd.s32 %s222, 1
      %s224 = scalar_select %p221, %s222, %s223
      %p227 = pneg %p221
      %p228 = scmp.eq.s32.totalorder %s22, 1
      %p229 = por %p227, %p228
      %p230 = scmp.ne.s32.totalorder %s222, %s225
      %p231 = scmp.eq.s32.totalorder %s22, 0
      %p232 = por %p230, %p231
      %p233 = scmp.ne.s32.totalorder %s222, %s225
      %p234 = scmp.eq.s32.totalorder %s27, 1
      %p235 = por %p233, %p234
      %p236 = scmp.ne.s32.totalorder %s225, %s226
      %p237 = scmp.eq.s32.totalorder %s27, 0
      %p238 = por %p236, %p237
      %p239 = scmp.ne.s32.totalorder %s225, %s226
      %p240 = scmp.eq.s32.totalorder %s28, 1
      %p241 = por %p239, %p240
      %p243 = scmp.ne.s32.totalorder %s226, %s242
      %p244 = scmp.eq.s32.totalorder %s28, 0
      %p245 = por %p243, %p244
      %p246 = scmp.le.s32.totalorder 1, %s22
      %p247 = scmp.lt.s32.totalorder %s22, 3
      %p248 = pnand %p246, %p247
      %p249 = pneg %p248
      // Predicated region
      $region9: #{tpu_custom_call.1} parent=5 // pred_check
        _
      $region10: #{tpu_custom_call.1} parent=5 // pred_check_branch
        %251 = sbr.rel (%p248) target = $region12
      $region11: #{tpu_custom_call.1} parent=5 // pred_region
        %s252 = ssub.s32 %s22, 1
        // Predicated region
        $region13: #{tpu_custom_call.1} parent=11 // pred_check
          %p253 = pneg %p135
        $region14: #{tpu_custom_call.1} parent=11 // pred_check_branch
          %255 = sbr.rel (%p253) target = $region16
        $region15: #{tpu_custom_call.1} parent=11 // pred_region
          _
        $region16: #{tpu_custom_call.1} parent=11 // pred_fallthru
          _
        // Predicated region
        $region17: #{tpu_custom_call.1} parent=11 // pred_check
          %p256 = pneg %p156
        $region18: #{tpu_custom_call.1} parent=11 // pred_check_branch
          %258 = sbr.rel (%p256) target = $region20
        $region19: #{tpu_custom_call.1} parent=11 // pred_region
          _
        $region20: #{tpu_custom_call.1} parent=11 // pred_fallthru
          _
      $region12: #{tpu_custom_call.1} parent=5 // pred_fallthru
        _
      %p259 = scmp.lt.s32.totalorder %s22, 2
      // Predicated region
      $region21: #{tpu_custom_call.1} parent=5 // pred_check
        %p260 = pneg %p259
      $region22: #{tpu_custom_call.1} parent=5 // pred_check_branch
        %262 = sbr.rel (%p260) target = $region24
      $region23: #{tpu_custom_call.1} parent=5 // pred_region
        // Predicated region
        $region25: #{tpu_custom_call.1} parent=23 // pred_check
          %p263 = pneg %p56
        $region26: #{tpu_custom_call.1} parent=23 // pred_check_branch
          %265 = sbr.rel (%p263) target = $region28
        $region27: #{tpu_custom_call.1} parent=23 // pred_region
          %s266 = sand.u32 %s46, 1
          %s267 = scalar_lea.sflag [#allocation6], %s266
          %s268 = sand.u32 %s46, 1
          %s269 = smul.addr %s268, 4
          %s270 = scalar_lea.vmem [#allocation5], %s269
          %s272 = ssub.s32 64, 64
          %273 = vsyncadd %s267, %s272
          %s274 = sadd.s32 %s30, %s29
          %s275 = smul.addr %s274, 64
          %s276 = scalar_lea.hbm %s0, %s275
          %s278 = sshll.u32 %s270, 4
          %s279 = int_to_ptr.vmem [resolvable:$true] %s278
          %281 = dma.hbm_to_vmem [thread:$0]  %s276, 64, %s279, %s267
        $region28: #{tpu_custom_call.1} parent=23 // pred_fallthru
          _
        // Predicated region
        $region29: #{tpu_custom_call.1} parent=23 // pred_check
          %p282 = pneg %p82
        $region30: #{tpu_custom_call.1} parent=23 // pred_check_branch
          %284 = sbr.rel (%p282) target = $region32
        $region31: #{tpu_custom_call.1} parent=23 // pred_region
          %s285 = sand.u32 %s22, 1
          %s286 = scalar_lea.sflag [#allocation9], %s285
          %s287 = sand.u32 %s72, 1
          %s288 = smul.addr %s287, 4
          %s289 = scalar_lea.vmem [#allocation8], %s288
          %s291 = ssub.s32 64, 64
          %292 = vsyncadd %s286, %s291
          %s293 = smul.addr %s29, 64
          %s294 = scalar_lea.hbm %s1, %s293
          %s296 = sshll.u32 %s289, 4
          %s297 = int_to_ptr.vmem [resolvable:$true] %s296
          %299 = dma.hbm_to_vmem [thread:$0]  %s294, 64, %s297, %s286
        $region32: #{tpu_custom_call.1} parent=23 // pred_fallthru
          _
        // Predicated region
        $region33: #{tpu_custom_call.1} parent=23 // pred_check
          %p300 = pneg %p108
        $region34: #{tpu_custom_call.1} parent=23 // pred_check_branch
          %302 = sbr.rel (%p300) target = $region36
        $region35: #{tpu_custom_call.1} parent=23 // pred_region
          %s303 = sand.u32 %s22, 1
          %s304 = scalar_lea.sflag [#allocation9], %s303
          %s305 = sand.u32 %s98, 1
          %s306 = smul.addr %s305, 4
          %s307 = scalar_lea.vmem [#allocation10], %s306
          %s309 = ssub.s32 64, 64
          %310 = vsyncadd %s304, %s309
          %s311 = smul.addr %s29, 64
          %s312 = scalar_lea.hbm %s2, %s311
          %s314 = sshll.u32 %s307, 4
          %s315 = int_to_ptr.vmem [resolvable:$true] %s314
          %317 = dma.hbm_to_vmem [thread:$0]  %s312, 64, %s315, %s304
        $region36: #{tpu_custom_call.1} parent=23 // pred_fallthru
          _
        // Predicated region
        $region37: #{tpu_custom_call.1} parent=23 // pred_check
          %p318 = pneg %p178
        $region38: #{tpu_custom_call.1} parent=23 // pred_check_branch
          %320 = sbr.rel (%p318) target = $region40
        $region39: #{tpu_custom_call.1} parent=23 // pred_region
          %p321 = scmp.lt.s32.totalorder %s29, 1
          %s322 = scalar_select %p321, %s29, 1
          %p323 = scmp.lt.s32.totalorder %s30, 0
          %s324 = scalar_select %p323, %s30, 0
          %s325 = sadd.s32 %s324, %s322
          %s326 = smul.addr %s325, 8
          %s327 = scalar_lea.vmem %s5, %s326
        $region40: #{tpu_custom_call.1} parent=23 // pred_fallthru
          _
        // Predicated region
        $region41: #{tpu_custom_call.1} parent=23 // pred_check
          %p328 = pneg %p204
        $region42: #{tpu_custom_call.1} parent=23 // pred_check_branch
          %330 = sbr.rel (%p328) target = $region44
        $region43: #{tpu_custom_call.1} parent=23 // pred_region
          %p331 = scmp.lt.s32.totalorder %s29, 1
          %s332 = scalar_select %p331, %s29, 1
          %s333 = smul.addr %s332, 8
          %s334 = scalar_lea.vmem %s6, %s333
        $region44: #{tpu_custom_call.1} parent=23 // pred_fallthru
          _
      $region24: #{tpu_custom_call.1} parent=5 // pred_fallthru
        _
      %p335 = scmp.le.s32.totalorder 1, %s22
      %p336 = scmp.lt.s32.totalorder %s22, 3
      %p337 = pnand %p335, %p336
      %p338 = pneg %p337
      // Predicated region
      $region45: #{tpu_custom_call.1} parent=5 // pred_check
        _
      $region46: #{tpu_custom_call.1} parent=5 // pred_check_branch
        %340 = sbr.rel (%p337) target = $region48
      $region47: #{tpu_custom_call.1} parent=5 // pred_region
        %s341 = ssub.s32 %s22, 1
        %s342 = sand.u32 %s49, 1
        %s343 = scalar_lea.sflag [#allocation6], %s342
        %s344 = sand.u32 %s49, 1
        %s345 = smul.addr %s344, 4
        %s346 = scalar_lea.vmem [#allocation5], %s345
        // Predicated region
        $region49: #{tpu_custom_call.1} parent=47 // pred_check
          %p347 = pneg %p62
        $region50: #{tpu_custom_call.1} parent=47 // pred_check_branch
          %349 = sbr.rel (%p347) target = $region52
        $region51: #{tpu_custom_call.1} parent=47 // pred_region
          %350 = dma.done %s343, 64
        $region52: #{tpu_custom_call.1} parent=47 // pred_fallthru
          _
        %s351 = sand.u32 %s27, 1
        %s352 = scalar_lea.sflag [#allocation9], %s351
        %s353 = sand.u32 %s75, 1
        %s354 = smul.addr %s353, 4
        %s355 = scalar_lea.vmem [#allocation8], %s354
        // Predicated region
        $region53: #{tpu_custom_call.1} parent=47 // pred_check
          %p356 = pneg %p88
        $region54: #{tpu_custom_call.1} parent=47 // pred_check_branch
          %358 = sbr.rel (%p356) target = $region56
        $region55: #{tpu_custom_call.1} parent=47 // pred_region
          %359 = dma.done %s352, 64
        $region56: #{tpu_custom_call.1} parent=47 // pred_fallthru
          _
        %s360 = sand.u32 %s27, 1
        %s361 = scalar_lea.sflag [#allocation9], %s360
        %s362 = sand.u32 %s101, 1
        %s363 = smul.addr %s362, 4
        %s364 = scalar_lea.vmem [#allocation10], %s363
        // Predicated region
        $region57: #{tpu_custom_call.1} parent=47 // pred_check
          %p365 = pneg %p114
        $region58: #{tpu_custom_call.1} parent=47 // pred_check_branch
          %367 = sbr.rel (%p365) target = $region60
        $region59: #{tpu_custom_call.1} parent=47 // pred_region
          %368 = dma.done %s361, 64
        $region60: #{tpu_custom_call.1} parent=47 // pred_fallthru
          _
        %s369 = sand.u32 %s49, 1
        %s370 = scalar_lea.sflag [#allocation6], %s369
        %s371 = sand.u32 %s49, 1
        %s372 = smul.addr %s371, 4
        %s373 = scalar_lea.vmem [#allocation5], %s372
        %p374 = pneg %p62
        %p375 = pneg %p59
        %s376 = sand.u32 %s27, 1
        %s377 = scalar_lea.sflag [#allocation9], %s376
        %s378 = sand.u32 %s75, 1
        %s379 = smul.addr %s378, 4
        %s380 = scalar_lea.vmem [#allocation8], %s379
        %p381 = pneg %p88
        %p382 = pneg %p85
        %s383 = sand.u32 %s27, 1
        %s384 = scalar_lea.sflag [#allocation9], %s383
        %s385 = sand.u32 %s101, 1
        %s386 = smul.addr %s385, 4
        %s387 = scalar_lea.vmem [#allocation10], %s386
        %p388 = pneg %p114
        %p389 = pneg %p111
        %p390 = pneg %p135
        %p391 = pneg %p132
        %p392 = pneg %p156
        %p393 = pneg %p153
        %p394 = scmp.lt.s32.totalorder %s31, 1
        %s395 = scalar_select %p394, %s31, 1
        %p396 = scmp.lt.s32.totalorder %s32, 0
        %s397 = scalar_select %p396, %s32, 0
        %s398 = sadd.s32 %s397, %s395
        %s399 = smul.addr %s398, 8
        %s400 = scalar_lea.vmem %s5, %s399
        %p401 = pneg %p184
        %p402 = pneg %p181
        %p403 = scmp.lt.s32.totalorder %s31, 1
        %s404 = scalar_select %p403, %s31, 1
        %s405 = smul.addr %s404, 8
        %s406 = scalar_lea.vmem %s6, %s405
        %p407 = pneg %p210
        %p408 = pneg %p207
        %p409 = pneg %p238
        %p410 = pneg %p235
        %s411 = sand.u32 %s225, 1
        %s412 = scalar_lea.sflag [#allocation7], %s411
        %s413 = sand.u32 %s225, 1
        %s414 = smul.addr %s413, 8
        %s415 = scalar_lea.vmem [#allocation11], %s414
        %p416 = scmp.lt.s32.totalorder %s31, 1
        %s417 = scalar_select %p416, %s31, 1
        %p418 = scmp.lt.s32.totalorder %s32, 0
        %s419 = scalar_select %p418, %s32, 0
        %s420 = sadd.s32 %s419, %s417
        %s421 = smul.addr %s420, 8
        %s422 = scalar_lea.vmem %s5, %s421
        %p423 = scmp.lt.s32.totalorder %s31, 1
        %s424 = scalar_select %p423, %s31, 1
        %s425 = smul.addr %s424, 8
        %s426 = scalar_lea.vmem %s6, %s425
        %p428 = scmp.eq.s32.totalorder %s32, 0
        // Predicated region
        $region61: #{tpu_custom_call.1} parent=47 // pred_check
          %p429 = pneg %p428
        $region62: #{tpu_custom_call.1} parent=47 // pred_check_branch
          %431 = sbr.rel (%p429) target = $region64
        $region63: #{tpu_custom_call.1} parent=47 // pred_region
          %v432 = vld [vmem:[%s3] sm:$0xf]
          %v433 = vld [vmem:[%s3 + $0x4] sm:$0xf]
          %v434 = vld [vmem:[%s3 + $0x8] sm:$0xf]
          %v435 = vld [vmem:[%s3 + $0xc] sm:$0xf]
          %v436 = vld [vmem:[%s355] sm:$0xf]
          %v441 = vunpack.c.l.b16 %v432
          %v442 = vunpack.c.l.b16 %v433
          %v443 = vunpack.c.l.b16 %v434
          %v444 = vunpack.c.l.b16 %v435
          %v445 = vpack.c.b16 %v442, %v441
          %v446 = vpack.c.b16 %v444, %v443
          %vm449 = vcmask 261120
          %v451 = vsel %vm449, %v436, 0
          %453 = vmatprep.subr.bf16.mxu0 0
          %454 = vmatpush1.bf16.msra.mxu0 0
          %455 = vmatprep.subr.bf16.mxu0 0
          %456 = vmatpush1.bf16.msra.mxu0 0
          %457 = vmatprep.subr.bf16.mxu0 0
          %458 = vmatpush1.bf16.msra.mxu0 0
          %459 = vmatprep.subr.bf16.mxu0 0
          %460 = vmatpush1.bf16.msra.mxu0 0
          %461 = vmatprep.subr.bf16.mxu0 0
          %462 = vmatpush1.bf16.msra.mxu0 0
          %463 = vmatprep.subr.bf16.mxu0 0
          %464 = vmatpush1.bf16.msra.mxu0 0
          %465 = vmatprep.subr.bf16.mxu0 0
          %466 = vmatpush1.bf16.msra.mxu0 %v446
          %467 = vmatprep.subr.bf16.mxu0 0
          %468 = vmatpush1.bf16.msra.mxu0 %v445
          %469 = vmatprep.subr.bf16.mxu0 0
          %470 = vmatpush2.bf16.msra.mxu0 0
          %471 = vmatprep.subr.bf16.mxu0 0
          %472 = vmatpush2.bf16.msra.mxu0 0
          %473 = vmatprep.subr.bf16.mxu0 0
          %474 = vmatpush2.bf16.msra.mxu0 0
          %475 = vmatprep.subr.bf16.mxu0 0
          %476 = vmatpush2.bf16.msra.mxu0 0
          %477 = vmatprep.subr.bf16.mxu0 0
          %478 = vmatpush2.bf16.msra.mxu0 0
          %479 = vmatprep.subr.bf16.mxu0 0
          %480 = vmatpush2.bf16.msra.mxu0 0
          %481 = vmatprep.subr.bf16.mxu0 0
          %482 = vmatpush2.bf16.msra.mxu0 0
          %483 = vmatprep.subr.bf16.mxu0 0
          %484 = vmatpush2.bf16.msra.mxu0 0
          %485 = vmatprep.mubr.bf16.mxu0 0
          %486 = vmatmul.mubr.bf16.gmra.mxu0 %v451
          %v487 = vpop.f32.mrf.mxu0
          %v488 = vadd.f32 0.0, %v487
          %v489 = vpop.f32.mrf.mxu0
          %v490 = vpop.f32.mrf.mxu0
          %v491 = vpop.f32.mrf.mxu0
          %492 = vdwg.mxu0
          %v493 = vpack.c.bf16 %v488, %v488
          %vm494 = vcmask 257024
          %495 = vst.msk [vmem:[#allocation2] sm:$0xf] %vm494, %v493
          %v496 = vld [vmem:[%s364] sm:$0xf]
          %v498 = vsel %vm449, %v496, 0
          %500 = vmatprep.subr.bf16.mxu0 0
          %501 = vmatpush1.bf16.msra.mxu0 0
          %502 = vmatprep.subr.bf16.mxu0 0
          %503 = vmatpush1.bf16.msra.mxu0 0
          %504 = vmatprep.subr.bf16.mxu0 0
          %505 = vmatpush1.bf16.msra.mxu0 0
          %506 = vmatprep.subr.bf16.mxu0 0
          %507 = vmatpush1.bf16.msra.mxu0 0
          %508 = vmatprep.subr.bf16.mxu0 0
          %509 = vmatpush1.bf16.msra.mxu0 0
          %510 = vmatprep.subr.bf16.mxu0 0
          %511 = vmatpush1.bf16.msra.mxu0 0
          %512 = vmatprep.subr.bf16.mxu0 0
          %513 = vmatpush1.bf16.msra.mxu0 %v446
          %514 = vmatprep.subr.bf16.mxu0 0
          %515 = vmatpush1.bf16.msra.mxu0 %v445
          %516 = vmatprep.subr.bf16.mxu0 0
          %517 = vmatpush2.bf16.msra.mxu0 0
          %518 = vmatprep.subr.bf16.mxu0 0
          %519 = vmatpush2.bf16.msra.mxu0 0
          %520 = vmatprep.subr.bf16.mxu0 0
          %521 = vmatpush2.bf16.msra.mxu0 0
          %522 = vmatprep.subr.bf16.mxu0 0
          %523 = vmatpush2.bf16.msra.mxu0 0
          %524 = vmatprep.subr.bf16.mxu0 0
          %525 = vmatpush2.bf16.msra.mxu0 0
          %526 = vmatprep.subr.bf16.mxu0 0
          %527 = vmatpush2.bf16.msra.mxu0 0
          %528 = vmatprep.subr.bf16.mxu0 0
          %529 = vmatpush2.bf16.msra.mxu0 0
          %530 = vmatprep.subr.bf16.mxu0 0
          %531 = vmatpush2.bf16.msra.mxu0 0
          %532 = vmatprep.mubr.bf16.mxu0 0
          %533 = vmatmul.mubr.bf16.gmra.mxu0 %v498
          %v534 = vpop.f32.mrf.mxu0
          %v535 = vadd.f32 0.0, %v534
          %v536 = vpop.f32.mrf.mxu0
          %v537 = vpop.f32.mrf.mxu0
          %v538 = vpop.f32.mrf.mxu0
          %539 = vdwg.mxu0
          %v540 = vld [vmem:[%s426] sm:$0xff]
          %542 = vset.pattern.permute.xlu0 0
          %543 = vperm.xlu0 %542, %v540
          %v544 = vpop.permute.xlu0 %543
          %v546 = vmul.f32 %v535, %v544
          %v547 = vpack.c.bf16 %v546, %v546
          %548 = vst.msk [vmem:[#allocation3] sm:$0xf] %vm494, %v547
        $region64: #{tpu_custom_call.1} parent=47 // pred_fallthru
          _
        %v549 = vld [vmem:[%s346] sm:$0xf]
        %v550 = vld [vmem:[%s3] sm:$0xf]
        %v551 = vld [vmem:[%s3 + $0x4] sm:$0xf]
        %v552 = vld [vmem:[%s3 + $0x8] sm:$0xf]
        %v553 = vld [vmem:[%s3 + $0xc] sm:$0xf]
        %v558 = vunpack.c.l.b16 %v550
        %v559 = vunpack.c.l.b16 %v551
        %v560 = vunpack.c.l.b16 %v552
        %v561 = vunpack.c.l.b16 %v553
        %v562 = vpack.c.b16 %v559, %v558
        %v563 = vpack.c.b16 %v561, %v560
        %vm566 = vcmask 261120
        %v568 = vsel %vm566, %v549, 0
        %570 = vmatprep.subr.bf16.mxu0 0
        %571 = vmatpush1.bf16.msra.mxu0 0
        %572 = vmatprep.subr.bf16.mxu0 0
        %573 = vmatpush1.bf16.msra.mxu0 0
        %574 = vmatprep.subr.bf16.mxu0 0
        %575 = vmatpush1.bf16.msra.mxu0 0
        %576 = vmatprep.subr.bf16.mxu0 0
        %577 = vmatpush1.bf16.msra.mxu0 0
        %578 = vmatprep.subr.bf16.mxu0 0
        %579 = vmatpush1.bf16.msra.mxu0 0
        %580 = vmatprep.subr.bf16.mxu0 0
        %581 = vmatpush1.bf16.msra.mxu0 0
        %582 = vmatprep.subr.bf16.mxu0 0
        %583 = vmatpush1.bf16.msra.mxu0 %v563
        %584 = vmatprep.subr.bf16.mxu0 0
        %585 = vmatpush1.bf16.msra.mxu0 %v562
        %586 = vmatprep.subr.bf16.mxu0 0
        %587 = vmatpush2.bf16.msra.mxu0 0
        %588 = vmatprep.subr.bf16.mxu0 0
        %589 = vmatpush2.bf16.msra.mxu0 0
        %590 = vmatprep.subr.bf16.mxu0 0
        %591 = vmatpush2.bf16.msra.mxu0 0
        %592 = vmatprep.subr.bf16.mxu0 0
        %593 = vmatpush2.bf16.msra.mxu0 0
        %594 = vmatprep.subr.bf16.mxu0 0
        %595 = vmatpush2.bf16.msra.mxu0 0
        %596 = vmatprep.subr.bf16.mxu0 0
        %597 = vmatpush2.bf16.msra.mxu0 0
        %598 = vmatprep.subr.bf16.mxu0 0
        %599 = vmatpush2.bf16.msra.mxu0 0
        %600 = vmatprep.subr.bf16.mxu0 0
        %601 = vmatpush2.bf16.msra.mxu0 0
        %602 = vmatprep.mubr.bf16.mxu0 0
        %603 = vmatmul.mubr.bf16.gmra.mxu0 %v568
        %v604 = vpop.f32.mrf.mxu0
        %v605 = vadd.f32 0.0, %v604
        %v606 = vpop.f32.mrf.mxu0
        %v607 = vpop.f32.mrf.mxu0
        %v608 = vpop.f32.mrf.mxu0
        %609 = vdwg.mxu0
        %v610 = vld [vmem:[%s422] sm:$0xff]
        %v611 = vmul.f32 %v610, 0.35355338
        %613 = vset.pattern.permute.xlu0 0
        %614 = vperm.xlu0 %613, %v611
        %v615 = vpop.permute.xlu0 %614
        %v617 = vmul.f32 %v605, %v615
        %v618 = vpack.c.bf16 %v617, %v617
        %v619 = vld [vmem:[#allocation2] sm:$0xf]
        %vm620 = vcmask 64512
        %v622 = vsel %vm620, %v618, 0
        %v625 = vsel %vm620, %v619, 0
        %627 = vmatprep.subr.bf16.mxu0 0
        %628 = vmatpush1.bf16.xpose.msra.mxu0 0
        %629 = vmatprep.subr.bf16.mxu0 0
        %630 = vmatpush1.bf16.xpose.msra.mxu0 0
        %631 = vmatprep.subr.bf16.mxu0 0
        %632 = vmatpush1.bf16.xpose.msra.mxu0 0
        %633 = vmatprep.subr.bf16.mxu0 0
        %634 = vmatpush1.bf16.xpose.msra.mxu0 0
        %635 = vmatprep.subr.bf16.mxu0 0
        %636 = vmatpush1.bf16.xpose.msra.mxu0 0
        %637 = vmatprep.subr.bf16.mxu0 0
        %638 = vmatpush1.bf16.xpose.msra.mxu0 0
        %639 = vmatprep.subr.bf16.mxu0 0
        %640 = vmatpush1.bf16.xpose.msra.mxu0 0
        %641 = vmatprep.subr.bf16.mxu0 0
        %642 = vmatpush1.bf16.xpose.msra.mxu0 %v625
        %643 = vmatprep.subr.bf16.mxu0 0
        %644 = vmatpush2.bf16.xpose.msra.mxu0 0
        %645 = vmatprep.subr.bf16.mxu0 0
        %646 = vmatpush2.bf16.xpose.msra.mxu0 0
        %647 = vmatprep.subr.bf16.mxu0 0
        %648 = vmatpush2.bf16.xpose.msra.mxu0 0
        %649 = vmatprep.subr.bf16.mxu0 0
        %650 = vmatpush2.bf16.xpose.msra.mxu0 0
        %651 = vmatprep.subr.bf16.mxu0 0
        %652 = vmatpush2.bf16.xpose.msra.mxu0 0
        %653 = vmatprep.subr.bf16.mxu0 0
        %654 = vmatpush2.bf16.xpose.msra.mxu0 0
        %655 = vmatprep.subr.bf16.mxu0 0
        %656 = vmatpush2.bf16.xpose.msra.mxu0 0
        %657 = vmatprep.subr.bf16.mxu0 0
        %658 = vmatpush2.bf16.xpose.msra.mxu0 0
        %659 = vmatprep.mubr.bf16.mxu0 0
        %660 = vmatmul.mubr.bf16.gmra.mxu0 %v622
        %v661 = vpop.f32.mrf.mxu0
        %v662 = vadd.f32 0.0, %v661
        %v663 = vpop.f32.mrf.mxu0
        %v664 = vpop.f32.mrf.mxu0
        %v665 = vpop.f32.mrf.mxu0
        %666 = vdwg.mxu0
        %v667 = vsel %vm620, %v662, -inf
        %668 = vmax.xlane.f32.xlu0 %v667
        %v669 = vpop.xlane.xlu0 %668
        %v670 = vsub.f32 %v662, %v669
        %v671 = vmul.f32 %v670, 1.442695
        %v672 = vpow.pop %v671
        %v673 = vsel %vm620, %v672, 0.0
        %674 = vadd.xlane.f32.xlu0 %v673
        %v675 = vpop.xlane.xlu0 %674
        %v676 = vrcp.pop %v675
        %v677 = vpack.c.bf16 %v672, %v672
        %v678 = vld [vmem:[#allocation3] sm:$0xf]
        %v680 = vsel %vm620, %v677, 0
        %vm682 = vcmask 1043456
        %v684 = vsel %vm682, %v678, 0
        %686 = vmatprep.subr.bf16.mxu0 0
        %687 = vmatpush1.bf16.msra.mxu0 0
        %688 = vmatprep.subr.bf16.mxu0 0
        %689 = vmatpush1.bf16.msra.mxu0 0
        %690 = vmatprep.subr.bf16.mxu0 0
        %691 = vmatpush1.bf16.msra.mxu0 0
        %692 = vmatprep.subr.bf16.mxu0 0
        %693 = vmatpush1.bf16.msra.mxu0 0
        %694 = vmatprep.subr.bf16.mxu0 0
        %695 = vmatpush1.bf16.msra.mxu0 0
        %696 = vmatprep.subr.bf16.mxu0 0
        %697 = vmatpush1.bf16.msra.mxu0 0
        %698 = vmatprep.subr.bf16.mxu0 0
        %699 = vmatpush1.bf16.msra.mxu0 0
        %700 = vmatprep.subr.bf16.mxu0 0
        %701 = vmatpush1.bf16.msra.mxu0 %v684
        %702 = vmatprep.subr.bf16.mxu0 0
        %703 = vmatpush2.bf16.msra.mxu0 0
        %704 = vmatprep.subr.bf16.mxu0 0
        %705 = vmatpush2.bf16.msra.mxu0 0
        %706 = vmatprep.subr.bf16.mxu0 0
        %707 = vmatpush2.bf16.msra.mxu0 0
        %708 = vmatprep.subr.bf16.mxu0 0
        %709 = vmatpush2.bf16.msra.mxu0 0
        %710 = vmatprep.subr.bf16.mxu0 0
        %711 = vmatpush2.bf16.msra.mxu0 0
        %712 = vmatprep.subr.bf16.mxu0 0
        %713 = vmatpush2.bf16.msra.mxu0 0
        %714 = vmatprep.subr.bf16.mxu0 0
        %715 = vmatpush2.bf16.msra.mxu0 0
        %716 = vmatprep.subr.bf16.mxu0 0
        %717 = vmatpush2.bf16.msra.mxu0 0
        %718 = vmatprep.mubr.bf16.mxu0 0
        %719 = vmatmul.mubr.bf16.gmra.mxu0 %v680
        %v720 = vpop.f32.mrf.mxu0
        %v721 = vadd.f32 0.0, %v720
        %v722 = vpop.f32.mrf.mxu0
        %v723 = vpop.f32.mrf.mxu0
        %v724 = vpop.f32.mrf.mxu0
        %725 = vdwg.mxu0
        %v726 = vmul.f32 %v721, %v676
        %v727 = vpack.c.bf16 %v726, %v726
        %vm728 = vcmask 60416
        %729 = vst.msk [vmem:[#allocation4] sm:$0xf] %vm728, %v727
        %v730 = vld [vmem:[#allocation2] sm:$0xf]
        %732 = vrot.lane.b32.xlu0 %v618, 120
        %v733 = vpop.permute.xlu0 %732
        %v735 = vunpack.c.l.b16 %v730
        %v736 = vpack.c.b16 %v735, %v735
        %737 = vrot.lane.b32.xlu0 %v736, 120
        %v738 = vpop.permute.xlu0 %737
        %v740 = vsel %vm620, %v733, 0
        %v743 = vsel %vm620, %v738, 0
        %745 = vmatprep.subr.bf16.mxu0 0
        %746 = vmatpush1.bf16.xpose.msra.mxu0 0
        %747 = vmatprep.subr.bf16.mxu0 0
        %748 = vmatpush1.bf16.xpose.msra.mxu0 0
        %749 = vmatprep.subr.bf16.mxu0 0
        %750 = vmatpush1.bf16.xpose.msra.mxu0 0
        %751 = vmatprep.subr.bf16.mxu0 0
        %752 = vmatpush1.bf16.xpose.msra.mxu0 0
        %753 = vmatprep.subr.bf16.mxu0 0
        %754 = vmatpush1.bf16.xpose.msra.mxu0 0
        %755 = vmatprep.subr.bf16.mxu0 0
        %756 = vmatpush1.bf16.xpose.msra.mxu0 0
        %757 = vmatprep.subr.bf16.mxu0 0
        %758 = vmatpush1.bf16.xpose.msra.mxu0 0
        %759 = vmatprep.subr.bf16.mxu0 0
        %760 = vmatpush1.bf16.xpose.msra.mxu0 %v743
        %761 = vmatprep.subr.bf16.mxu0 0
        %762 = vmatpush2.bf16.xpose.msra.mxu0 0
        %763 = vmatprep.subr.bf16.mxu0 0
        %764 = vmatpush2.bf16.xpose.msra.mxu0 0
        %765 = vmatprep.subr.bf16.mxu0 0
        %766 = vmatpush2.bf16.xpose.msra.mxu0 0
        %767 = vmatprep.subr.bf16.mxu0 0
        %768 = vmatpush2.bf16.xpose.msra.mxu0 0
        %769 = vmatprep.subr.bf16.mxu0 0
        %770 = vmatpush2.bf16.xpose.msra.mxu0 0
        %771 = vmatprep.subr.bf16.mxu0 0
        %772 = vmatpush2.bf16.xpose.msra.mxu0 0
        %773 = vmatprep.subr.bf16.mxu0 0
        %774 = vmatpush2.bf16.xpose.msra.mxu0 0
        %775 = vmatprep.subr.bf16.mxu0 0
        %776 = vmatpush2.bf16.xpose.msra.mxu0 0
        %777 = vmatprep.mubr.bf16.mxu0 0
        %778 = vmatmul.mubr.bf16.gmra.mxu0 %v740
        %v779 = vpop.f32.mrf.mxu0
        %v780 = vadd.f32 0.0, %v779
        %v781 = vpop.f32.mrf.mxu0
        %v782 = vpop.f32.mrf.mxu0
        %v783 = vpop.f32.mrf.mxu0
        %784 = vdwg.mxu0
        %v785 = vsel %vm620, %v780, -inf
        %786 = vmax.xlane.f32.xlu0 %v785
        %v787 = vpop.xlane.xlu0 %786
        %v788 = vsub.f32 %v780, %v787
        %v789 = vmul.f32 %v788, 1.442695
        %v790 = vpow.pop %v789
        %v791 = vsel %vm620, %v790, 0.0
        %792 = vadd.xlane.f32.xlu0 %v791
        %v793 = vpop.xlane.xlu0 %792
        %v794 = vrcp.pop %v793
        %v795 = vpack.c.bf16 %v790, %v790
        %v796 = vld [vmem:[#allocation3] sm:$0xf]
        %v798 = vunpack.c.l.b16 %v796
        %v799 = vpack.c.b16 %v798, %v798
        %800 = vrot.lane.b32.xlu0 %v799, 120
        %v801 = vpop.permute.xlu0 %800
        %v803 = vsel %vm620, %v795, 0
        %v806 = vsel %vm682, %v801, 0
        %808 = vmatprep.subr.bf16.mxu0 0
        %809 = vmatpush1.bf16.msra.mxu0 0
        %810 = vmatprep.subr.bf16.mxu0 0
        %811 = vmatpush1.bf16.msra.mxu0 0
        %812 = vmatprep.subr.bf16.mxu0 0
        %813 = vmatpush1.bf16.msra.mxu0 0
        %814 = vmatprep.subr.bf16.mxu0 0
        %815 = vmatpush1.bf16.msra.mxu0 0
        %816 = vmatprep.subr.bf16.mxu0 0
        %817 = vmatpush1.bf16.msra.mxu0 0
        %818 = vmatprep.subr.bf16.mxu0 0
        %819 = vmatpush1.bf16.msra.mxu0 0
        %820 = vmatprep.subr.bf16.mxu0 0
        %821 = vmatpush1.bf16.msra.mxu0 0
        %822 = vmatprep.subr.bf16.mxu0 0
        %823 = vmatpush1.bf16.msra.mxu0 %v806
        %824 = vmatprep.subr.bf16.mxu0 0
        %825 = vmatpush2.bf16.msra.mxu0 0
        %826 = vmatprep.subr.bf16.mxu0 0
        %827 = vmatpush2.bf16.msra.mxu0 0
        %828 = vmatprep.subr.bf16.mxu0 0
        %829 = vmatpush2.bf16.msra.mxu0 0
        %830 = vmatprep.subr.bf16.mxu0 0
        %831 = vmatpush2.bf16.msra.mxu0 0
        %832 = vmatprep.subr.bf16.mxu0 0
        %833 = vmatpush2.bf16.msra.mxu0 0
        %834 = vmatprep.subr.bf16.mxu0 0
        %835 = vmatpush2.bf16.msra.mxu0 0
        %836 = vmatprep.subr.bf16.mxu0 0
        %837 = vmatpush2.bf16.msra.mxu0 0
        %838 = vmatprep.subr.bf16.mxu0 0
        %839 = vmatpush2.bf16.msra.mxu0 0
        %840 = vmatprep.mubr.bf16.mxu0 0
        %841 = vmatmul.mubr.bf16.gmra.mxu0 %v803
        %v842 = vpop.f32.mrf.mxu0
        %v843 = vadd.f32 0.0, %v842
        %v844 = vpop.f32.mrf.mxu0
        %v845 = vpop.f32.mrf.mxu0
        %v846 = vpop.f32.mrf.mxu0
        %847 = vdwg.mxu0
        %v848 = vmul.f32 %v843, %v794
        %v849 = vpack.c.bf16 %v848, %v848
        %v851 = vunpack.c.l.b16 %v849
        %v852 = vpack.c.b16 %v851, %v851
        %853 = vrot.lane.b32.xlu0 %v852, 8
        %v854 = vpop.permute.xlu0 %853
        %vm856 = vcmask 126016
        %857 = vst.msk [vmem:[#allocation4] sm:$0xf] %vm856, %v854
        %v858 = vld [vmem:[#allocation2] sm:$0xf]
        %859 = vrot.lane.b32.xlu0 %v618, 112
        %v860 = vpop.permute.xlu0 %859
        %v862 = vunpack.c.l.b16 %v858
        %v863 = vpack.c.b16 %v862, %v862
        %864 = vrot.lane.b32.xlu0 %v863, 112
        %v865 = vpop.permute.xlu0 %864
        %v867 = vsel %vm620, %v860, 0
        %v870 = vsel %vm620, %v865, 0
        %872 = vmatprep.subr.bf16.mxu0 0
        %873 = vmatpush1.bf16.xpose.msra.mxu0 0
        %874 = vmatprep.subr.bf16.mxu0 0
        %875 = vmatpush1.bf16.xpose.msra.mxu0 0
        %876 = vmatprep.subr.bf16.mxu0 0
        %877 = vmatpush1.bf16.xpose.msra.mxu0 0
        %878 = vmatprep.subr.bf16.mxu0 0
        %879 = vmatpush1.bf16.xpose.msra.mxu0 0
        %880 = vmatprep.subr.bf16.mxu0 0
        %881 = vmatpush1.bf16.xpose.msra.mxu0 0
        %882 = vmatprep.subr.bf16.mxu0 0
        %883 = vmatpush1.bf16.xpose.msra.mxu0 0
        %884 = vmatprep.subr.bf16.mxu0 0
        %885 = vmatpush1.bf16.xpose.msra.mxu0 0
        %886 = vmatprep.subr.bf16.mxu0 0
        %887 = vmatpush1.bf16.xpose.msra.mxu0 %v870
        %888 = vmatprep.subr.bf16.mxu0 0
        %889 = vmatpush2.bf16.xpose.msra.mxu0 0
        %890 = vmatprep.subr.bf16.mxu0 0
        %891 = vmatpush2.bf16.xpose.msra.mxu0 0
        %892 = vmatprep.subr.bf16.mxu0 0
        %893 = vmatpush2.bf16.xpose.msra.mxu0 0
        %894 = vmatprep.subr.bf16.mxu0 0
        %895 = vmatpush2.bf16.xpose.msra.mxu0 0
        %896 = vmatprep.subr.bf16.mxu0 0
        %897 = vmatpush2.bf16.xpose.msra.mxu0 0
        %898 = vmatprep.subr.bf16.mxu0 0
        %899 = vmatpush2.bf16.xpose.msra.mxu0 0
        %900 = vmatprep.subr.bf16.mxu0 0
        %901 = vmatpush2.bf16.xpose.msra.mxu0 0
        %902 = vmatprep.subr.bf16.mxu0 0
        %903 = vmatpush2.bf16.xpose.msra.mxu0 0
        %904 = vmatprep.mubr.bf16.mxu0 0
        %905 = vmatmul.mubr.bf16.gmra.mxu0 %v867
        %v906 = vpop.f32.mrf.mxu0
        %v907 = vadd.f32 0.0, %v906
        %v908 = vpop.f32.mrf.mxu0
        %v909 = vpop.f32.mrf.mxu0
        %v910 = vpop.f32.mrf.mxu0
        %911 = vdwg.mxu0
        %v912 = vsel %vm620, %v907, -inf
        %913 = vmax.xlane.f32.xlu0 %v912
        %v914 = vpop.xlane.xlu0 %913
        %v915 = vsub.f32 %v907, %v914
        %v916 = vmul.f32 %v915, 1.442695
        %v917 = vpow.pop %v916
        %v918 = vsel %vm620, %v917, 0.0
        %919 = vadd.xlane.f32.xlu0 %v918
        %v920 = vpop.xlane.xlu0 %919
        %v921 = vrcp.pop %v920
        %v922 = vpack.c.bf16 %v917, %v917
        %v923 = vld [vmem:[#allocation3] sm:$0xf]
        %v925 = vunpack.c.l.b16 %v923
        %v926 = vpack.c.b16 %v925, %v925
        %927 = vrot.lane.b32.xlu0 %v926, 112
        %v928 = vpop.permute.xlu0 %927
        %v930 = vsel %vm620, %v922, 0
        %v933 = vsel %vm682, %v928, 0
        %935 = vmatprep.subr.bf16.mxu0 0
        %936 = vmatpush1.bf16.msra.mxu0 0
        %937 = vmatprep.subr.bf16.mxu0 0
        %938 = vmatpush1.bf16.msra.mxu0 0
        %939 = vmatprep.subr.bf16.mxu0 0
        %940 = vmatpush1.bf16.msra.mxu0 0
        %941 = vmatprep.subr.bf16.mxu0 0
        %942 = vmatpush1.bf16.msra.mxu0 0
        %943 = vmatprep.subr.bf16.mxu0 0
        %944 = vmatpush1.bf16.msra.mxu0 0
        %945 = vmatprep.subr.bf16.mxu0 0
        %946 = vmatpush1.bf16.msra.mxu0 0
        %947 = vmatprep.subr.bf16.mxu0 0
        %948 = vmatpush1.bf16.msra.mxu0 0
        %949 = vmatprep.subr.bf16.mxu0 0
        %950 = vmatpush1.bf16.msra.mxu0 %v933
        %951 = vmatprep.subr.bf16.mxu0 0
        %952 = vmatpush2.bf16.msra.mxu0 0
        %953 = vmatprep.subr.bf16.mxu0 0
        %954 = vmatpush2.bf16.msra.mxu0 0
        %955 = vmatprep.subr.bf16.mxu0 0
        %956 = vmatpush2.bf16.msra.mxu0 0
        %957 = vmatprep.subr.bf16.mxu0 0
        %958 = vmatpush2.bf16.msra.mxu0 0
        %959 = vmatprep.subr.bf16.mxu0 0
        %960 = vmatpush2.bf16.msra.mxu0 0
        %961 = vmatprep.subr.bf16.mxu0 0
        %962 = vmatpush2.bf16.msra.mxu0 0
        %963 = vmatprep.subr.bf16.mxu0 0
        %964 = vmatpush2.bf16.msra.mxu0 0
        %965 = vmatprep.subr.bf16.mxu0 0
        %966 = vmatpush2.bf16.msra.mxu0 0
        %967 = vmatprep.mubr.bf16.mxu0 0
        %968 = vmatmul.mubr.bf16.gmra.mxu0 %v930
        %v969 = vpop.f32.mrf.mxu0
        %v970 = vadd.f32 0.0, %v969
        %v971 = vpop.f32.mrf.mxu0
        %v972 = vpop.f32.mrf.mxu0
        %v973 = vpop.f32.mrf.mxu0
        %974 = vdwg.mxu0
        %v975 = vmul.f32 %v970, %v921
        %v976 = vpack.c.bf16 %v975, %v975
        %v978 = vunpack.c.l.b16 %v976
        %v979 = vpack.c.b16 %v978, %v978
        %980 = vrot.lane.b32.xlu0 %v979, 16
        %v981 = vpop.permute.xlu0 %980
        %vm983 = vcmask 191616
        %984 = vst.msk [vmem:[#allocation4] sm:$0xf] %vm983, %v981
        %v985 = vld [vmem:[#allocation2] sm:$0xf]
        %986 = vrot.lane.b32.xlu0 %v618, 104
        %v987 = vpop.permute.xlu0 %986
        %v989 = vunpack.c.l.b16 %v985
        %v990 = vpack.c.b16 %v989, %v989
        %991 = vrot.lane.b32.xlu0 %v990, 104
        %v992 = vpop.permute.xlu0 %991
        %v994 = vsel %vm620, %v987, 0
        %v997 = vsel %vm620, %v992, 0
        %999 = vmatprep.subr.bf16.mxu0 0
        %1000 = vmatpush1.bf16.xpose.msra.mxu0 0
        %1001 = vmatprep.subr.bf16.mxu0 0
        %1002 = vmatpush1.bf16.xpose.msra.mxu0 0
        %1003 = vmatprep.subr.bf16.mxu0 0
        %1004 = vmatpush1.bf16.xpose.msra.mxu0 0
        %1005 = vmatprep.subr.bf16.mxu0 0
        %1006 = vmatpush1.bf16.xpose.msra.mxu0 0
        %1007 = vmatprep.subr.bf16.mxu0 0
        %1008 = vmatpush1.bf16.xpose.msra.mxu0 0
        %1009 = vmatprep.subr.bf16.mxu0 0
        %1010 = vmatpush1.bf16.xpose.msra.mxu0 0
        %1011 = vmatprep.subr.bf16.mxu0 0
        %1012 = vmatpush1.bf16.xpose.msra.mxu0 0
        %1013 = vmatprep.subr.bf16.mxu0 0
        %1014 = vmatpush1.bf16.xpose.msra.mxu0 %v997
        %1015 = vmatprep.subr.bf16.mxu0 0
        %1016 = vmatpush2.bf16.xpose.msra.mxu0 0
        %1017 = vmatprep.subr.bf16.mxu0 0
        %1018 = vmatpush2.bf16.xpose.msra.mxu0 0
        %1019 = vmatprep.subr.bf16.mxu0 0
        %1020 = vmatpush2.bf16.xpose.msra.mxu0 0
        %1021 = vmatprep.subr.bf16.mxu0 0
        %1022 = vmatpush2.bf16.xpose.msra.mxu0 0
        %1023 = vmatprep.subr.bf16.mxu0 0
        %1024 = vmatpush2.bf16.xpose.msra.mxu0 0
        %1025 = vmatprep.subr.bf16.mxu0 0
        %1026 = vmatpush2.bf16.xpose.msra.mxu0 0
        %1027 = vmatprep.subr.bf16.mxu0 0
        %1028 = vmatpush2.bf16.xpose.msra.mxu0 0
        %1029 = vmatprep.subr.bf16.mxu0 0
        %1030 = vmatpush2.bf16.xpose.msra.mxu0 0
        %1031 = vmatprep.mubr.bf16.mxu0 0
        %1032 = vmatmul.mubr.bf16.gmra.mxu0 %v994
        %v1033 = vpop.f32.mrf.mxu0
        %v1034 = vadd.f32 0.0, %v1033
        %v1035 = vpop.f32.mrf.mxu0
        %v1036 = vpop.f32.mrf.mxu0
        %v1037 = vpop.f32.mrf.mxu0
        %1038 = vdwg.mxu0
        %v1039 = vsel %vm620, %v1034, -inf
        %1040 = vmax.xlane.f32.xlu0 %v1039
        %v1041 = vpop.xlane.xlu0 %1040
        %v1042 = vsub.f32 %v1034, %v1041
        %v1043 = vmul.f32 %v1042, 1.442695
        %v1044 = vpow.pop %v1043
        %v1045 = vsel %vm620, %v1044, 0.0
        %1046 = vadd.xlane.f32.xlu0 %v1045
        %v1047 = vpop.xlane.xlu0 %1046
        %v1048 = vrcp.pop %v1047
        %v1049 = vpack.c.bf16 %v1044, %v1044
        %v1050 = vld [vmem:[#allocation3] sm:$0xf]
        %v1052 = vunpack.c.l.b16 %v1050
        %v1053 = vpack.c.b16 %v1052, %v1052
        %1054 = vrot.lane.b32.xlu0 %v1053, 104
        %v1055 = vpop.permute.xlu0 %1054
        %v1057 = vsel %vm620, %v1049, 0
        %v1060 = vsel %vm682, %v1055, 0
        %1062 = vmatprep.subr.bf16.mxu0 0
        %1063 = vmatpush1.bf16.msra.mxu0 0
        %1064 = vmatprep.subr.bf16.mxu0 0
        %1065 = vmatpush1.bf16.msra.mxu0 0
        %1066 = vmatprep.subr.bf16.mxu0 0
        %1067 = vmatpush1.bf16.msra.mxu0 0
        %1068 = vmatprep.subr.bf16.mxu0 0
        %1069 = vmatpush1.bf16.msra.mxu0 0
        %1070 = vmatprep.subr.bf16.mxu0 0
        %1071 = vmatpush1.bf16.msra.mxu0 0
        %1072 = vmatprep.subr.bf16.mxu0 0
        %1073 = vmatpush1.bf16.msra.mxu0 0
        %1074 = vmatprep.subr.bf16.mxu0 0
        %1075 = vmatpush1.bf16.msra.mxu0 0
        %1076 = vmatprep.subr.bf16.mxu0 0
        %1077 = vmatpush1.bf16.msra.mxu0 %v1060
        %1078 = vmatprep.subr.bf16.mxu0 0
        %1079 = vmatpush2.bf16.msra.mxu0 0
        %1080 = vmatprep.subr.bf16.mxu0 0
        %1081 = vmatpush2.bf16.msra.mxu0 0
        %1082 = vmatprep.subr.bf16.mxu0 0
        %1083 = vmatpush2.bf16.msra.mxu0 0
        %1084 = vmatprep.subr.bf16.mxu0 0
        %1085 = vmatpush2.bf16.msra.mxu0 0
        %1086 = vmatprep.subr.bf16.mxu0 0
        %1087 = vmatpush2.bf16.msra.mxu0 0
        %1088 = vmatprep.subr.bf16.mxu0 0
        %1089 = vmatpush2.bf16.msra.mxu0 0
        %1090 = vmatprep.subr.bf16.mxu0 0
        %1091 = vmatpush2.bf16.msra.mxu0 0
        %1092 = vmatprep.subr.bf16.mxu0 0
        %1093 = vmatpush2.bf16.msra.mxu0 0
        %1094 = vmatprep.mubr.bf16.mxu0 0
        %1095 = vmatmul.mubr.bf16.gmra.mxu0 %v1057
        %v1096 = vpop.f32.mrf.mxu0
        %v1097 = vadd.f32 0.0, %v1096
        %v1098 = vpop.f32.mrf.mxu0
        %v1099 = vpop.f32.mrf.mxu0
        %v1100 = vpop.f32.mrf.mxu0
        %1101 = vdwg.mxu0
        %v1102 = vmul.f32 %v1097, %v1048
        %v1103 = vpack.c.bf16 %v1102, %v1102
        %v1105 = vunpack.c.l.b16 %v1103
        %v1106 = vpack.c.b16 %v1105, %v1105
        %1107 = vrot.lane.b32.xlu0 %v1106, 24
        %v1108 = vpop.permute.xlu0 %1107
        %vm1110 = vcmask 257216
        %1111 = vst.msk [vmem:[#allocation4] sm:$0xf] %vm1110, %v1108
        %v1112 = vld [vmem:[#allocation4] sm:$0xf]
        %v1113 = vld [vmem:[%s4] sm:$0xf]
        %v1114 = vld [vmem:[%s4 + $0x4] sm:$0xf]
        %v1115 = vld [vmem:[%s4 + $0x8] sm:$0xf]
        %v1116 = vld [vmem:[%s4 + $0xc] sm:$0xf]
        %v1121 = vunpack.c.l.b16 %v1113
        %v1122 = vunpack.c.l.b16 %v1114
        %v1123 = vunpack.c.l.b16 %v1115
        %v1124 = vunpack.c.l.b16 %v1116
        %v1125 = vpack.c.b16 %v1122, %v1121
        %v1126 = vpack.c.b16 %v1124, %v1123
        %v1130 = vsel %vm566, %v1112, 0
        %1132 = vmatprep.subr.bf16.mxu0 0
        %1133 = vmatpush1.bf16.msra.mxu0 0
        %1134 = vmatprep.subr.bf16.mxu0 0
        %1135 = vmatpush1.bf16.msra.mxu0 0
        %1136 = vmatprep.subr.bf16.mxu0 0
        %1137 = vmatpush1.bf16.msra.mxu0 0
        %1138 = vmatprep.subr.bf16.mxu0 0
        %1139 = vmatpush1.bf16.msra.mxu0 0
        %1140 = vmatprep.subr.bf16.mxu0 0
        %1141 = vmatpush1.bf16.msra.mxu0 0
        %1142 = vmatprep.subr.bf16.mxu0 0
        %1143 = vmatpush1.bf16.msra.mxu0 0
        %1144 = vmatprep.subr.bf16.mxu0 0
        %1145 = vmatpush1.bf16.msra.mxu0 %v1126
        %1146 = vmatprep.subr.bf16.mxu0 0
        %1147 = vmatpush1.bf16.msra.mxu0 %v1125
        %1148 = vmatprep.subr.bf16.mxu0 0
        %1149 = vmatpush2.bf16.msra.mxu0 0
        %1150 = vmatprep.subr.bf16.mxu0 0
        %1151 = vmatpush2.bf16.msra.mxu0 0
        %1152 = vmatprep.subr.bf16.mxu0 0
        %1153 = vmatpush2.bf16.msra.mxu0 0
        %1154 = vmatprep.subr.bf16.mxu0 0
        %1155 = vmatpush2.bf16.msra.mxu0 0
        %1156 = vmatprep.subr.bf16.mxu0 0
        %1157 = vmatpush2.bf16.msra.mxu0 0
        %1158 = vmatprep.subr.bf16.mxu0 0
        %1159 = vmatpush2.bf16.msra.mxu0 0
        %1160 = vmatprep.subr.bf16.mxu0 0
        %1161 = vmatpush2.bf16.msra.mxu0 0
        %1162 = vmatprep.subr.bf16.mxu0 0
        %1163 = vmatpush2.bf16.msra.mxu0 0
        %1164 = vmatprep.mubr.bf16.mxu0 0
        %1165 = vmatmul.mubr.bf16.gmra.mxu0 %v1130
        %v1166 = vpop.f32.mrf.mxu0
        %v1167 = vadd.f32 0.0, %v1166
        %v1168 = vpop.f32.mrf.mxu0
        %v1169 = vpop.f32.mrf.mxu0
        %v1170 = vpop.f32.mrf.mxu0
        %1171 = vdwg.mxu0
        %1172 = vst.msk [vmem:[%s415] sm:$0xff] %vm566, %v1167
        %s1173 = sand.u32 %s225, 1
        %s1174 = scalar_lea.sflag [#allocation7], %s1173
        %s1175 = sand.u32 %s225, 1
        %s1176 = smul.addr %s1175, 8
        %s1177 = scalar_lea.vmem [#allocation11], %s1176
        // Predicated region
        $region65: #{tpu_custom_call.1} parent=47 // pred_check
          %p1178 = pneg %p235
        $region66: #{tpu_custom_call.1} parent=47 // pred_check_branch
          %1180 = sbr.rel (%p1178) target = $region68
        $region67: #{tpu_custom_call.1} parent=47 // pred_region
          %s1182 = ssub.s32 128, 128
          %1183 = vsyncadd %s1174, %s1182
          %s1184 = sadd.s32 %s32, %s31
          %s1185 = smul.addr %s1184, 128
          %s1186 = scalar_lea.hbm %s7, %s1185
          %s1188 = sshll.u32 %s1177, 4
          %s1189 = int_to_ptr.vmem [resolvable:$true] %s1188
          %1191 = dma.vmem_to_hbm [thread:$0]  %s1189, 128, %s1186, %s1174
        $region68: #{tpu_custom_call.1} parent=47 // pred_fallthru
          _
      $region48: #{tpu_custom_call.1} parent=5 // pred_fallthru
        _
      %p1192 = scmp.le.s32.totalorder 2, %s22
      // Predicated region
      $region69: #{tpu_custom_call.1} parent=5 // pred_check
        %p1193 = pneg %p1192
      $region70: #{tpu_custom_call.1} parent=5 // pred_check_branch
        %1195 = sbr.rel (%p1193) target = $region72
      $region71: #{tpu_custom_call.1} parent=5 // pred_region
        %s1196 = ssub.s32 %s22, 2
        // Predicated region
        $region73: #{tpu_custom_call.1} parent=71 // pred_check
          %p1197 = pneg %p241
        $region74: #{tpu_custom_call.1} parent=71 // pred_check_branch
          %1199 = sbr.rel (%p1197) target = $region76
        $region75: #{tpu_custom_call.1} parent=71 // pred_region
          %s1200 = sand.u32 %s226, 1
          %s1201 = scalar_lea.sflag [#allocation7], %s1200
          %s1202 = sand.u32 %s226, 1
          %s1203 = smul.addr %s1202, 8
          %s1204 = scalar_lea.vmem [#allocation11], %s1203
          %1205 = dma.done %s1201, 128
        $region76: #{tpu_custom_call.1} parent=71 // pred_fallthru
          _
      $region72: #{tpu_custom_call.1} parent=5 // pred_fallthru
        _
    $region6: #{tpu_custom_call.1} parent=1 // loop_footer
      %s26 = sadd.s32 1, %s22
    $region7: #{tpu_custom_call.1} parent=1 // loop_footer_branch
      %21 = sbr.rel target = $region3
    $region8: #{tpu_custom_call.1} parent=1 // loop_exit
      _
    %1206 = vsyncpa [#allocation6], 1
    %s1207 = scalar_lea.sflag [#allocation6], 1
    %1208 = vsyncpa %s1207, 1
    %1209 = vsyncpa [#allocation9], 1
    %s1210 = scalar_lea.sflag [#allocation9], 1
    %1211 = vsyncpa %s1210, 1
    %1212 = vsyncpa [#allocation7], 1
    %s1213 = scalar_lea.sflag [#allocation7], 1
    %1214 = vsyncpa %s1213, 1

</llo_original>
